<compile_context>
chip_gen: v6e
topology: v6e:2x2x1
jax: 0.10.0
libtpu: 0.0.40
codegen_flags: <defaults>
</compile_context>

<pallas_src>
import numpy as np
import jax
import jax.numpy as jnp
from jax import lax
from jax.experimental import pallas as pl
from jax.experimental.pallas import tpu as pltpu

# --- config: MobileNetV3Block(in_channels=4, out_channels=8, kernel_size=3,
#                              stride=1, padding=1, se=True, expansion=2, fcreduction=4)
N, CIN, H, W = 2, 4, 16, 16
COUT = 8
KSIZE, STRIDE, PAD = 3, 1, 1
EXPANSION, FCRED = 2, 4
CMID = CIN * EXPANSION          # begin_out_channels = 8
CSE = CMID // FCRED             # SE bottleneck = 2
HW = H * W                      # 256 (spatial preserved: k=3, s=1, p=1)
NHW = N * HW                    # 512 — both images concatenated on the lane axis
CINP = 8                        # input channels padded to a full sublane group
K1P = 9 * CINP                  # im2col rows = 72
CFUSE = CMID + COUT             # 16 (beginconv + outadj fused matmul rows)
LRELU = 0.1
BN_EPS = 1e-5
SLAB_R, SLAB_C = 16, 128        # packed-parameter slab
MASK_R = 16                     # 9 tap masks + N image-selector rows, padded to 16

# static lane shifts for the 3x3-neighborhood taps (modulo the concatenated width)
SHIFTS = [(-((t // 3 - 1) * W + (t % 3 - 1))) % NHW for t in range(9)]


# ----------------------------------------------------------------------------
# Fused Pallas kernel (whole batch in one step)
# ----------------------------------------------------------------------------
def fused_kernel(x_ref, mask_ref, slab_ref, out_ref, pk_ref):
    x = x_ref[...]                                  # (CINP, NHW) = (8, 512)
    ws = slab_ref[...]                              # (16, 128) packed param slab

    # static slices of the packed slab (layout set up in prepare())
    w_fused = ws[0:CFUSE, 0:K1P]                    # (16, 72) begin+adj weights (BN folded)
    b_fused = ws[0:CFUSE, K1P:K1P + 1]              # (16, 1)
    wdw     = ws[0:CMID, 73:82]                     # (8, 9)  depthwise per-tap weights
    bdw     = ws[0:CMID, 82:83]                     # (8, 1)
    wfc1    = ws[0:CMID, 83:85]                     # (8, 2)  SE fc1
    wfc2t   = ws[0:CMID, 85:87]                     # (8, 2)  SE fc2 (transposed)
    bfc2    = ws[0:CMID, 87:88]                     # (8, 1)
    wend    = ws[0:COUT, 88:96]                     # (8, 8)  1x1 endconv
    bend    = ws[0:COUT, 96:97]                     # (8, 1)
    bfc1    = ws[0:1, 97:99]                        # (1, 2)

    def lrelu(z):
        return jnp.where(z > 0, z, LRELU * z)

    def taps_of(a):
        """9 zero-padded shifted copies of a channel-major (C, NHW) image pair."""
        out = []
        for t in range(9):
            if t == 4:                              # center tap: no shift / no mask
                out.append(a)
            else:
                out.append(pltpu.roll(a, shift=SHIFTS[t], axis=1)
                           * mask_ref[t:t + 1, :])
        return out

    # ---- beginconv(+BN) and residual outadj merged into one im2col matmul ----
    for t, tap in enumerate(taps_of(x)):
        pk_ref[t * CINP:(t + 1) * CINP, :] = tap    # (72, 512) patch matrix in VMEM
    y16 = jnp.dot(w_fused, pk_ref[...],
                  preferred_element_type=jnp.float32) + b_fused
    h1 = lrelu(y16[0:CMID, :])                      # beginconv branch
    res = y16[CMID:CFUSE, :]                        # outadj residual branch

    # ---- depthwise 3x3 (+folded BN) + LeakyReLU, tree-summed taps ------------
    dt = taps_of(h1)
    prods = [dt[t] * wdw[:, t:t + 1] for t in range(9)]
    while len(prods) > 1:
        nxt = [prods[i] + prods[i + 1] for i in range(0, len(prods) - 1, 2)]
        if len(prods) % 2:
            nxt.append(prods[-1])
        prods = nxt
    h2 = lrelu(prods[0] + bdw)                      # (CMID, NHW)

    # ---- squeeze & excite (per image; images occupy disjoint lane halves) ----
    scale = None
    for b in range(N):
        hb = h2[:, b * HW:(b + 1) * HW]                                     # (CMID, HW)
        m = jnp.mean(hb, axis=1, keepdims=True)                             # (CMID, 1)
        t1 = jnp.sum(wfc1 * m, axis=0, keepdims=True) + bfc1                # (1, CSE)
        t1 = jnp.maximum(t1, 0.0)                                           # relu
        t2 = jnp.sum(wfc2t * t1, axis=1, keepdims=True) + bfc2              # (CMID, 1)
        t2 = t2 * jnp.clip(t2 + 3.0, 0.0, 6.0) * (1.0 / 6.0)                # h_swish
        part = t2 * mask_ref[9 + b:10 + b, :]       # broadcast to this image's lanes
        scale = part if scale is None else scale + part
    h2 = h2 * scale

    # ---- 1x1 endconv + LeakyReLU + residual add -------------------------------
    y = jnp.dot(wend, h2, preferred_element_type=jnp.float32) + bend
    out_ref[...] = lrelu(y) + res


# ----------------------------------------------------------------------------
# pallas_call wrapper (single grid step, single core — cheapest at this size)
# ----------------------------------------------------------------------------
def _fused_call(x_cm, masks, wslab):
    rep = lambda i: (0, 0)
    flops = int(2 * CFUSE * K1P * NHW         # merged im2col matmul
                + 2 * COUT * CMID * NHW       # 1x1 endconv
                + 2 * 9 * CMID * NHW          # depthwise taps
                + 24 * CMID * NHW)            # elementwise epilogues
    bytes_acc = int(4 * (CINP * NHW + MASK_R * NHW + SLAB_R * SLAB_C + COUT * NHW))
    return pl.pallas_call(
        fused_kernel,
        out_shape=jax.ShapeDtypeStruct((COUT, NHW), jnp.float32),
        grid=(1,),
        in_specs=[
            pl.BlockSpec((CINP, NHW), rep),          # x, channel-major, batch lane-concat
            pl.BlockSpec((MASK_R, NHW), rep),        # tap masks + image-selector rows
            pl.BlockSpec((SLAB_R, SLAB_C), rep),     # packed, BN-folded parameter slab
        ],
        out_specs=pl.BlockSpec((COUT, NHW), rep),
        scratch_shapes=[pltpu.VMEM((K1P, NHW), jnp.float32)],   # im2col patch matrix
        compiler_params=pltpu.CompilerParams(
            dimension_semantics=("arbitrary",)),
        cost_estimate=pl.CostEstimate(
            flops=flops, transcendentals=0, bytes_accessed=bytes_acc),
    )(x_cm, masks, wslab)


# ----------------------------------------------------------------------------
# Parameter init / BN folding / host-side packing (done once, outside jit)
# ----------------------------------------------------------------------------
def init_params(key):
    ks = jax.random.split(key, 20)

    def nrm(k, shape, scale=0.2):
        return scale * jax.random.normal(k, shape, dtype=jnp.float32)

    p = {}
    p["w_begin"] = nrm(ks[0], (KSIZE, KSIZE, CIN, CMID))     # HWIO
    p["b_begin"] = nrm(ks[1], (CMID,), 0.1)
    p["g1"] = 1.0 + nrm(ks[2], (CMID,), 0.1)
    p["bt1"] = nrm(ks[3], (CMID,), 0.1)
    p["m1"] = nrm(ks[4], (CMID,), 0.1)
    p["v1"] = jax.random.uniform(ks[5], (CMID,), jnp.float32, 0.5, 1.5)
    p["w_dw"] = nrm(ks[6], (3, 3, 1, CMID))                  # depthwise HWIO
    p["b_dw"] = nrm(ks[7], (CMID,), 0.1)
    p["g2"] = 1.0 + nrm(ks[8], (CMID,), 0.1)
    p["bt2"] = nrm(ks[9], (CMID,), 0.1)
    p["m2"] = nrm(ks[10], (CMID,), 0.1)
    p["v2"] = jax.random.uniform(ks[11], (CMID,), jnp.float32, 0.5, 1.5)
    p["w_fc1"] = nrm(ks[12], (CMID, CSE))
    p["b_fc1"] = nrm(ks[13], (CSE,), 0.1)
    p["w_fc2"] = nrm(ks[14], (CSE, CMID))
    p["b_fc2"] = nrm(ks[15], (CMID,), 0.1)
    p["w_end"] = nrm(ks[16], (CMID, COUT))                   # 1x1 conv as matmul
    p["b_end"] = nrm(ks[17], (COUT,), 0.1)
    p["w_adj"] = nrm(ks[18], (KSIZE, KSIZE, CIN, COUT))      # HWIO
    p["b_adj"] = nrm(ks[19], (COUT,), 0.1)
    return p


def prepare(p):
    """Fold eval-mode BN into conv weights and pack everything into two lane-dense slabs."""
    s1 = p["g1"] / jnp.sqrt(p["v1"] + BN_EPS)
    sh1 = p["bt1"] - p["m1"] * s1
    s2 = p["g2"] / jnp.sqrt(p["v2"] + BN_EPS)
    sh2 = p["bt2"] - p["m2"] * s2

    pad_ci = ((0, 0), (0, 0), (0, CINP - CIN), (0, 0))       # zero-pad cin 4 -> 8
    w1 = jnp.pad(p["w_begin"], pad_ci).reshape(K1P, CMID)    # rows ordered (ky,kx,ci)
    wadj = jnp.pad(p["w_adj"], pad_ci).reshape(K1P, COUT)
    w_fused = jnp.concatenate([(w1 * s1[None, :]).T, wadj.T], axis=0)        # (16, 72)
    b_fused = jnp.concatenate([p["b_begin"] * s1 + sh1, p["b_adj"]])         # (16,)
    wdw = (p["w_dw"].reshape(9, CMID) * s2[None, :]).T                       # (8, 9)
    bdw = p["b_dw"] * s2 + sh2                                               # (8,)

    slab = jnp.zeros((SLAB_R, SLAB_C), jnp.float32)
    slab = slab.at[0:CFUSE, 0:K1P].set(w_fused)
    slab = slab.at[0:CFUSE, K1P].set(b_fused)
    slab = slab.at[0:CMID, 73:82].set(wdw)
    slab = slab.at[0:CMID, 82].set(bdw)
    slab = slab.at[0:CMID, 83:85].set(p["w_fc1"])
    slab = slab.at[0:CMID, 85:87].set(p["w_fc2"].T)
    slab = slab.at[0:CMID, 87].set(p["b_fc2"])
    slab = slab.at[0:COUT, 88:96].set(p["w_end"].T)
    slab = slab.at[0:COUT, 96].set(p["b_end"])
    slab = slab.at[0, 97:99].set(p["b_fc1"])

    # tap boundary masks (per image: lane = b*HW + hw) and image-selector rows
    lane = np.arange(NHW)
    row = (lane % HW) // W
    col = lane % W
    m = np.zeros((MASK_R, NHW), np.float32)
    for t in range(9):
        dy, dx = t // 3 - 1, t % 3 - 1
        ok = (row + dy >= 0) & (row + dy < H) & (col + dx >= 0) & (col + dx < W)
        m[t] = ok.astype(np.float32)
    for b in range(N):
        m[9 + b, b * HW:(b + 1) * HW] = 1.0
    return jnp.asarray(m), slab


@jax.jit
def mobilenetv3_block(x_nchw, masks, wslab):
    # NCHW -> channel-major with the two images concatenated along the lane axis
    x = x_nchw.astype(jnp.float32).reshape(N, CIN, HW)
    x = jnp.transpose(x, (1, 0, 2)).reshape(CIN, NHW)
    x = jnp.pad(x, ((0, CINP - CIN), (0, 0)))                # pad channels 4 -> 8
    y = _fused_call(x, masks, wslab)                         # (COUT, NHW)
    return y.reshape(COUT, N, HW).transpose(1, 0, 2).reshape(N, COUT, H, W)


# ----------------------------------------------------------------------------
# Pure-JAX reference (correctness check)
# ----------------------------------------------------------------------------
def reference(x_nchw, p):
    x = jnp.transpose(x_nchw, (0, 2, 3, 1))

    def conv(inp, w, b, stride, pad, groups=1):
        y = lax.conv_general_dilated(
            inp, w, (stride, stride), ((pad, pad), (pad, pad)),
            dimension_numbers=("NHWC", "HWIO", "NHWC"),
            feature_group_count=groups)
        return y + b

    def bn(inp, g, bt, m, v):
        return g * (inp - m) / jnp.sqrt(v + BN_EPS) + bt

    def lrelu(z):
        return jnp.where(z > 0, z, LRELU * z)

    out = conv(x, p["w_begin"], p["b_begin"], STRIDE, PAD)
    out = lrelu(bn(out, p["g1"], p["bt1"], p["m1"], p["v1"]))
    out = conv(out, p["w_dw"], p["b_dw"], 1, 1, groups=CMID)
    out = lrelu(bn(out, p["g2"], p["bt2"], p["m2"], p["v2"]))
    mean = jnp.mean(out, axis=(1, 2))                                 # (N, CMID)
    mean = jnp.maximum(mean @ p["w_fc1"] + p["b_fc1"], 0.0)
    mean = mean @ p["w_fc2"] + p["b_fc2"]
    mean = mean * jnp.clip(mean + 3.0, 0.0, 6.0) / 6.0                # h_swish
    out = out * mean[:, None, None, :]
    out = lrelu(out @ p["w_end"] + p["b_end"])                        # 1x1 endconv
    res = conv(x, p["w_adj"], p["b_adj"], STRIDE, PAD)                # outadj
    return jnp.transpose(res + out, (0, 3, 1, 2))


# ----------------------------------------------------------------------------
if __name__ == "__main__":
    key = jax.random.PRNGKey(0)
    kx, kp = jax.random.split(key)
    x = jax.random.normal(kx, (N, CIN, H, W), dtype=jnp.float32)
    params = init_params(kp)
    masks, wslab = prepare(params)        # BN folding / packing done once, outside jit

    y = jax.block_until_ready(mobilenetv3_block(x, masks, wslab))
    y_ref = jax.block_until_ready(reference(x, params))

    assert y.shape == (N, COUT, H, W), y.shape
    err = float(jnp.max(jnp.abs(y - y_ref)))
    assert err < 2e-3, f"max abs err {err}"
    print("KERNEL_OK")
</pallas_src>

<mosaic_0001>
module attributes {stable_mosaic.version = 11 : i64} {
  func.func @fused_kernel(%arg0: i32, %arg1: memref<8x512xf32, #tpu.memory_space<vmem>>, %arg2: memref<16x512xf32, #tpu.memory_space<vmem>>, %arg3: memref<16x128xf32, #tpu.memory_space<vmem>>, %arg4: memref<8x512xf32, #tpu.memory_space<vmem>>, %arg5: memref<72x512xf32, #tpu.memory_space<vmem>>) attributes {dimension_semantics = [#tpu.dimension_semantics<arbitrary>], iteration_bounds = array<i64: 1>, scalar_prefetch = 0 : i64, scratch_operands = 1 : i64, tpu.core_type = #tpu.core_type<tc>, window_params = [{pipeline_mode = #tpu.pipeline_mode<synchronous>, transform_indices = @transform_0, window_bounds = array<i64: 8, 512>}, {pipeline_mode = #tpu.pipeline_mode<synchronous>, transform_indices = @transform_1, window_bounds = array<i64: 16, 512>}, {pipeline_mode = #tpu.pipeline_mode<synchronous>, transform_indices = @transform_2, window_bounds = array<i64: 16, 128>}, {pipeline_mode = #tpu.pipeline_mode<synchronous>, transform_indices = @transform_3, window_bounds = array<i64: 8, 512>}]} {
    %c0 = arith.constant 0 : index
    %c0_0 = arith.constant 0 : index
    %0 = vector.load %arg1[%c0, %c0_0] : memref<8x512xf32, #tpu.memory_space<vmem>>, vector<8x512xf32>
    %c0_1 = arith.constant 0 : index
    %c0_2 = arith.constant 0 : index
    %1 = vector.load %arg3[%c0_1, %c0_2] : memref<16x128xf32, #tpu.memory_space<vmem>>, vector<16x128xf32>
    %2 = vector.extract_strided_slice %1 {offsets = [0, 0], sizes = [16, 72], strides = [1, 1]} : vector<16x128xf32> to vector<16x72xf32>
    %3 = vector.extract_strided_slice %1 {offsets = [0, 72], sizes = [16, 1], strides = [1, 1]} : vector<16x128xf32> to vector<16x1xf32>
    %4 = vector.extract_strided_slice %1 {offsets = [0, 73], sizes = [8, 9], strides = [1, 1]} : vector<16x128xf32> to vector<8x9xf32>
    %5 = vector.extract_strided_slice %1 {offsets = [0, 82], sizes = [8, 1], strides = [1, 1]} : vector<16x128xf32> to vector<8x1xf32>
    %6 = vector.extract_strided_slice %1 {offsets = [0, 83], sizes = [8, 2], strides = [1, 1]} : vector<16x128xf32> to vector<8x2xf32>
    %7 = vector.extract_strided_slice %1 {offsets = [0, 85], sizes = [8, 2], strides = [1, 1]} : vector<16x128xf32> to vector<8x2xf32>
    %8 = vector.extract_strided_slice %1 {offsets = [0, 87], sizes = [8, 1], strides = [1, 1]} : vector<16x128xf32> to vector<8x1xf32>
    %9 = vector.extract_strided_slice %1 {offsets = [0, 88], sizes = [8, 8], strides = [1, 1]} : vector<16x128xf32> to vector<8x8xf32>
    %10 = vector.extract_strided_slice %1 {offsets = [0, 96], sizes = [8, 1], strides = [1, 1]} : vector<16x128xf32> to vector<8x1xf32>
    %11 = vector.extract_strided_slice %1 {offsets = [0, 97], sizes = [1, 2], strides = [1, 1]} : vector<16x128xf32> to vector<1x2xf32>
    %c17_i32 = arith.constant 17 : i32
    %12 = tpu.dynamic_rotate %0 by %c17_i32 dim 1 : vector<8x512xf32>, i32 -> vector<8x512xf32>
    %c0_3 = arith.constant 0 : index
    %c0_4 = arith.constant 0 : index
    %13 = vector.load %arg2[%c0_3, %c0_4] : memref<16x512xf32, #tpu.memory_space<vmem>>, vector<1x512xf32>
    %14 = vector.broadcast %13 : vector<1x512xf32> to vector<8x512xf32>
    %15 = arith.mulf %12, %14 : vector<8x512xf32>
    %c16_i32 = arith.constant 16 : i32
    %16 = tpu.dynamic_rotate %0 by %c16_i32 dim 1 : vector<8x512xf32>, i32 -> vector<8x512xf32>
    %c1 = arith.constant 1 : index
    %c0_5 = arith.constant 0 : index
    %17 = vector.load %arg2[%c1, %c0_5] : memref<16x512xf32, #tpu.memory_space<vmem>>, vector<1x512xf32>
    %18 = vector.broadcast %17 : vector<1x512xf32> to vector<8x512xf32>
    %19 = arith.mulf %16, %18 : vector<8x512xf32>
    %c15_i32 = arith.constant 15 : i32
    %20 = tpu.dynamic_rotate %0 by %c15_i32 dim 1 : vector<8x512xf32>, i32 -> vector<8x512xf32>
    %c2 = arith.constant 2 : index
    %c0_6 = arith.constant 0 : index
    %21 = vector.load %arg2[%c2, %c0_6] : memref<16x512xf32, #tpu.memory_space<vmem>>, vector<1x512xf32>
    %22 = vector.broadcast %21 : vector<1x512xf32> to vector<8x512xf32>
    %23 = arith.mulf %20, %22 : vector<8x512xf32>
    %c1_i32 = arith.constant 1 : i32
    %24 = tpu.dynamic_rotate %0 by %c1_i32 dim 1 : vector<8x512xf32>, i32 -> vector<8x512xf32>
    %c3 = arith.constant 3 : index
    %c0_7 = arith.constant 0 : index
    %25 = vector.load %arg2[%c3, %c0_7] : memref<16x512xf32, #tpu.memory_space<vmem>>, vector<1x512xf32>
    %26 = vector.broadcast %25 : vector<1x512xf32> to vector<8x512xf32>
    %27 = arith.mulf %24, %26 : vector<8x512xf32>
    %c511_i32 = arith.constant 511 : i32
    %28 = tpu.dynamic_rotate %0 by %c511_i32 dim 1 : vector<8x512xf32>, i32 -> vector<8x512xf32>
    %c5 = arith.constant 5 : index
    %c0_8 = arith.constant 0 : index
    %29 = vector.load %arg2[%c5, %c0_8] : memref<16x512xf32, #tpu.memory_space<vmem>>, vector<1x512xf32>
    %30 = vector.broadcast %29 : vector<1x512xf32> to vector<8x512xf32>
    %31 = arith.mulf %28, %30 : vector<8x512xf32>
    %c497_i32 = arith.constant 497 : i32
    %32 = tpu.dynamic_rotate %0 by %c497_i32 dim 1 : vector<8x512xf32>, i32 -> vector<8x512xf32>
    %c6 = arith.constant 6 : index
    %c0_9 = arith.constant 0 : index
    %33 = vector.load %arg2[%c6, %c0_9] : memref<16x512xf32, #tpu.memory_space<vmem>>, vector<1x512xf32>
    %34 = vector.broadcast %33 : vector<1x512xf32> to vector<8x512xf32>
    %35 = arith.mulf %32, %34 : vector<8x512xf32>
    %c496_i32 = arith.constant 496 : i32
    %36 = tpu.dynamic_rotate %0 by %c496_i32 dim 1 : vector<8x512xf32>, i32 -> vector<8x512xf32>
    %c7 = arith.constant 7 : index
    %c0_10 = arith.constant 0 : index
    %37 = vector.load %arg2[%c7, %c0_10] : memref<16x512xf32, #tpu.memory_space<vmem>>, vector<1x512xf32>
    %38 = vector.broadcast %37 : vector<1x512xf32> to vector<8x512xf32>
    %39 = arith.mulf %36, %38 : vector<8x512xf32>
    %c495_i32 = arith.constant 495 : i32
    %40 = tpu.dynamic_rotate %0 by %c495_i32 dim 1 : vector<8x512xf32>, i32 -> vector<8x512xf32>
    %c8 = arith.constant 8 : index
    %c0_11 = arith.constant 0 : index
    %41 = vector.load %arg2[%c8, %c0_11] : memref<16x512xf32, #tpu.memory_space<vmem>>, vector<1x512xf32>
    %42 = vector.broadcast %41 : vector<1x512xf32> to vector<8x512xf32>
    %43 = arith.mulf %40, %42 : vector<8x512xf32>
    %c0_12 = arith.constant 0 : index
    %c0_13 = arith.constant 0 : index
    %44 = vector.load %arg5[%c0_12, %c0_13] : memref<72x512xf32, #tpu.memory_space<vmem>>, vector<8x512xf32>
    tpu.vector_store %arg5[%c0_12, %c0_13], %15 {strides = array<i32>} : memref<72x512xf32, #tpu.memory_space<vmem>>, vector<8x512xf32>,
    %c8_14 = arith.constant 8 : index
    %c0_15 = arith.constant 0 : index
    %45 = vector.load %arg5[%c8_14, %c0_15] : memref<72x512xf32, #tpu.memory_space<vmem>>, vector<8x512xf32>
    tpu.vector_store %arg5[%c8_14, %c0_15], %19 {strides = array<i32>} : memref<72x512xf32, #tpu.memory_space<vmem>>, vector<8x512xf32>,
    %c16 = arith.constant 16 : index
    %c0_16 = arith.constant 0 : index
    %46 = vector.load %arg5[%c16, %c0_16] : memref<72x512xf32, #tpu.memory_space<vmem>>, vector<8x512xf32>
    tpu.vector_store %arg5[%c16, %c0_16], %23 {strides = array<i32>} : memref<72x512xf32, #tpu.memory_space<vmem>>, vector<8x512xf32>,
    %c24 = arith.constant 24 : index
    %c0_17 = arith.constant 0 : index
    %47 = vector.load %arg5[%c24, %c0_17] : memref<72x512xf32, #tpu.memory_space<vmem>>, vector<8x512xf32>
    tpu.vector_store %arg5[%c24, %c0_17], %27 {strides = array<i32>} : memref<72x512xf32, #tpu.memory_space<vmem>>, vector<8x512xf32>,
    %c32 = arith.constant 32 : index
    %c0_18 = arith.constant 0 : index
    %48 = vector.load %arg5[%c32, %c0_18] : memref<72x512xf32, #tpu.memory_space<vmem>>, vector<8x512xf32>
    tpu.vector_store %arg5[%c32, %c0_18], %0 {strides = array<i32>} : memref<72x512xf32, #tpu.memory_space<vmem>>, vector<8x512xf32>,
    %c40 = arith.constant 40 : index
    %c0_19 = arith.constant 0 : index
    %49 = vector.load %arg5[%c40, %c0_19] : memref<72x512xf32, #tpu.memory_space<vmem>>, vector<8x512xf32>
    tpu.vector_store %arg5[%c40, %c0_19], %31 {strides = array<i32>} : memref<72x512xf32, #tpu.memory_space<vmem>>, vector<8x512xf32>,
    %c48 = arith.constant 48 : index
    %c0_20 = arith.constant 0 : index
    %50 = vector.load %arg5[%c48, %c0_20] : memref<72x512xf32, #tpu.memory_space<vmem>>, vector<8x512xf32>
    tpu.vector_store %arg5[%c48, %c0_20], %35 {strides = array<i32>} : memref<72x512xf32, #tpu.memory_space<vmem>>, vector<8x512xf32>,
    %c56 = arith.constant 56 : index
    %c0_21 = arith.constant 0 : index
    %51 = vector.load %arg5[%c56, %c0_21] : memref<72x512xf32, #tpu.memory_space<vmem>>, vector<8x512xf32>
    tpu.vector_store %arg5[%c56, %c0_21], %39 {strides = array<i32>} : memref<72x512xf32, #tpu.memory_space<vmem>>, vector<8x512xf32>,
    %c64 = arith.constant 64 : index
    %c0_22 = arith.constant 0 : index
    %52 = vector.load %arg5[%c64, %c0_22] : memref<72x512xf32, #tpu.memory_space<vmem>>, vector<8x512xf32>
    tpu.vector_store %arg5[%c64, %c0_22], %43 {strides = array<i32>} : memref<72x512xf32, #tpu.memory_space<vmem>>, vector<8x512xf32>,
    %c0_23 = arith.constant 0 : index
    %c0_24 = arith.constant 0 : index
    %53 = vector.load %arg5[%c0_23, %c0_24] : memref<72x512xf32, #tpu.memory_space<vmem>>, vector<72x512xf32>
    %cst = arith.constant dense<0.000000e+00> : vector<16x512xf32>
    %54 = tpu.matmul %2, %53, %cst {dimension_numbers = #tpu.dot_dimension_numbers<[1], [0], [0], [1], [0, 0, 1, 1], [], []>} : vector<16x72xf32>, vector<72x512xf32>, vector<16x512xf32> -> vector<16x512xf32>
    %55 = vector.broadcast %3 : vector<16x1xf32> to vector<16x512xf32>
    %56 = arith.addf %54, %55 : vector<16x512xf32>
    %57 = vector.extract_strided_slice %56 {offsets = [0, 0], sizes = [8, 512], strides = [1, 1]} : vector<16x512xf32> to vector<8x512xf32>
    %cst_25 = arith.constant 0.000000e+00 : f32
    %58 = vector.broadcast %cst_25 : f32 to vector<8x512xf32>
    %59 = arith.cmpf ogt, %57, %58 : vector<8x512xf32>
    %cst_26 = arith.constant 1.000000e-01 : f32
    %60 = vector.broadcast %cst_26 : f32 to vector<8x512xf32>
    %61 = arith.mulf %60, %57 : vector<8x512xf32>
    %62 = arith.select %59, %57, %61 : vector<8x512xi1>, vector<8x512xf32>
    %63 = vector.extract_strided_slice %56 {offsets = [8, 0], sizes = [8, 512], strides = [1, 1]} : vector<16x512xf32> to vector<8x512xf32>
    %c17_i32_27 = arith.constant 17 : i32
    %64 = tpu.dynamic_rotate %62 by %c17_i32_27 dim 1 : vector<8x512xf32>, i32 -> vector<8x512xf32>
    %c0_28 = arith.constant 0 : index
    %c0_29 = arith.constant 0 : index
    %65 = vector.load %arg2[%c0_28, %c0_29] : memref<16x512xf32, #tpu.memory_space<vmem>>, vector<1x512xf32>
    %66 = vector.broadcast %65 : vector<1x512xf32> to vector<8x512xf32>
    %67 = arith.mulf %64, %66 : vector<8x512xf32>
    %c16_i32_30 = arith.constant 16 : i32
    %68 = tpu.dynamic_rotate %62 by %c16_i32_30 dim 1 : vector<8x512xf32>, i32 -> vector<8x512xf32>
    %c1_31 = arith.constant 1 : index
    %c0_32 = arith.constant 0 : index
    %69 = vector.load %arg2[%c1_31, %c0_32] : memref<16x512xf32, #tpu.memory_space<vmem>>, vector<1x512xf32>
    %70 = vector.broadcast %69 : vector<1x512xf32> to vector<8x512xf32>
    %71 = arith.mulf %68, %70 : vector<8x512xf32>
    %c15_i32_33 = arith.constant 15 : i32
    %72 = tpu.dynamic_rotate %62 by %c15_i32_33 dim 1 : vector<8x512xf32>, i32 -> vector<8x512xf32>
    %c2_34 = arith.constant 2 : index
    %c0_35 = arith.constant 0 : index
    %73 = vector.load %arg2[%c2_34, %c0_35] : memref<16x512xf32, #tpu.memory_space<vmem>>, vector<1x512xf32>
    %74 = vector.broadcast %73 : vector<1x512xf32> to vector<8x512xf32>
    %75 = arith.mulf %72, %74 : vector<8x512xf32>
    %c1_i32_36 = arith.constant 1 : i32
    %76 = tpu.dynamic_rotate %62 by %c1_i32_36 dim 1 : vector<8x512xf32>, i32 -> vector<8x512xf32>
    %c3_37 = arith.constant 3 : index
    %c0_38 = arith.constant 0 : index
    %77 = vector.load %arg2[%c3_37, %c0_38] : memref<16x512xf32, #tpu.memory_space<vmem>>, vector<1x512xf32>
    %78 = vector.broadcast %77 : vector<1x512xf32> to vector<8x512xf32>
    %79 = arith.mulf %76, %78 : vector<8x512xf32>
    %c511_i32_39 = arith.constant 511 : i32
    %80 = tpu.dynamic_rotate %62 by %c511_i32_39 dim 1 : vector<8x512xf32>, i32 -> vector<8x512xf32>
    %c5_40 = arith.constant 5 : index
    %c0_41 = arith.constant 0 : index
    %81 = vector.load %arg2[%c5_40, %c0_41] : memref<16x512xf32, #tpu.memory_space<vmem>>, vector<1x512xf32>
    %82 = vector.broadcast %81 : vector<1x512xf32> to vector<8x512xf32>
    %83 = arith.mulf %80, %82 : vector<8x512xf32>
    %c497_i32_42 = arith.constant 497 : i32
    %84 = tpu.dynamic_rotate %62 by %c497_i32_42 dim 1 : vector<8x512xf32>, i32 -> vector<8x512xf32>
    %c6_43 = arith.constant 6 : index
    %c0_44 = arith.constant 0 : index
    %85 = vector.load %arg2[%c6_43, %c0_44] : memref<16x512xf32, #tpu.memory_space<vmem>>, vector<1x512xf32>
    %86 = vector.broadcast %85 : vector<1x512xf32> to vector<8x512xf32>
    %87 = arith.mulf %84, %86 : vector<8x512xf32>
    %c496_i32_45 = arith.constant 496 : i32
    %88 = tpu.dynamic_rotate %62 by %c496_i32_45 dim 1 : vector<8x512xf32>, i32 -> vector<8x512xf32>
    %c7_46 = arith.constant 7 : index
    %c0_47 = arith.constant 0 : index
    %89 = vector.load %arg2[%c7_46, %c0_47] : memref<16x512xf32, #tpu.memory_space<vmem>>, vector<1x512xf32>
    %90 = vector.broadcast %89 : vector<1x512xf32> to vector<8x512xf32>
    %91 = arith.mulf %88, %90 : vector<8x512xf32>
    %c495_i32_48 = arith.constant 495 : i32
    %92 = tpu.dynamic_rotate %62 by %c495_i32_48 dim 1 : vector<8x512xf32>, i32 -> vector<8x512xf32>
    %c8_49 = arith.constant 8 : index
    %c0_50 = arith.constant 0 : index
    %93 = vector.load %arg2[%c8_49, %c0_50] : memref<16x512xf32, #tpu.memory_space<vmem>>, vector<1x512xf32>
    %94 = vector.broadcast %93 : vector<1x512xf32> to vector<8x512xf32>
    %95 = arith.mulf %92, %94 : vector<8x512xf32>
    %96 = vector.extract_strided_slice %4 {offsets = [0, 0], sizes = [8, 1], strides = [1, 1]} : vector<8x9xf32> to vector<8x1xf32>
    %97 = vector.broadcast %96 : vector<8x1xf32> to vector<8x512xf32>
    %98 = arith.mulf %67, %97 : vector<8x512xf32>
    %99 = vector.extract_strided_slice %4 {offsets = [0, 1], sizes = [8, 1], strides = [1, 1]} : vector<8x9xf32> to vector<8x1xf32>
    %100 = vector.broadcast %99 : vector<8x1xf32> to vector<8x512xf32>
    %101 = arith.mulf %71, %100 : vector<8x512xf32>
    %102 = vector.extract_strided_slice %4 {offsets = [0, 2], sizes = [8, 1], strides = [1, 1]} : vector<8x9xf32> to vector<8x1xf32>
    %103 = vector.broadcast %102 : vector<8x1xf32> to vector<8x512xf32>
    %104 = arith.mulf %75, %103 : vector<8x512xf32>
    %105 = vector.extract_strided_slice %4 {offsets = [0, 3], sizes = [8, 1], strides = [1, 1]} : vector<8x9xf32> to vector<8x1xf32>
    %106 = vector.broadcast %105 : vector<8x1xf32> to vector<8x512xf32>
    %107 = arith.mulf %79, %106 : vector<8x512xf32>
    %108 = vector.extract_strided_slice %4 {offsets = [0, 4], sizes = [8, 1], strides = [1, 1]} : vector<8x9xf32> to vector<8x1xf32>
    %109 = vector.broadcast %108 : vector<8x1xf32> to vector<8x512xf32>
    %110 = arith.mulf %62, %109 : vector<8x512xf32>
    %111 = vector.extract_strided_slice %4 {offsets = [0, 5], sizes = [8, 1], strides = [1, 1]} : vector<8x9xf32> to vector<8x1xf32>
    %112 = vector.broadcast %111 : vector<8x1xf32> to vector<8x512xf32>
    %113 = arith.mulf %83, %112 : vector<8x512xf32>
    %114 = vector.extract_strided_slice %4 {offsets = [0, 6], sizes = [8, 1], strides = [1, 1]} : vector<8x9xf32> to vector<8x1xf32>
    %115 = vector.broadcast %114 : vector<8x1xf32> to vector<8x512xf32>
    %116 = arith.mulf %87, %115 : vector<8x512xf32>
    %117 = vector.extract_strided_slice %4 {offsets = [0, 7], sizes = [8, 1], strides = [1, 1]} : vector<8x9xf32> to vector<8x1xf32>
    %118 = vector.broadcast %117 : vector<8x1xf32> to vector<8x512xf32>
    %119 = arith.mulf %91, %118 : vector<8x512xf32>
    %120 = vector.extract_strided_slice %4 {offsets = [0, 8], sizes = [8, 1], strides = [1, 1]} : vector<8x9xf32> to vector<8x1xf32>
    %121 = vector.broadcast %120 : vector<8x1xf32> to vector<8x512xf32>
    %122 = arith.mulf %95, %121 : vector<8x512xf32>
    %123 = arith.addf %98, %101 : vector<8x512xf32>
    %124 = arith.addf %104, %107 : vector<8x512xf32>
    %125 = arith.addf %110, %113 : vector<8x512xf32>
    %126 = arith.addf %116, %119 : vector<8x512xf32>
    %127 = arith.addf %123, %124 : vector<8x512xf32>
    %128 = arith.addf %125, %126 : vector<8x512xf32>
    %129 = arith.addf %127, %128 : vector<8x512xf32>
    %130 = arith.addf %129, %122 : vector<8x512xf32>
    %131 = vector.broadcast %5 : vector<8x1xf32> to vector<8x512xf32>
    %132 = arith.addf %130, %131 : vector<8x512xf32>
    %cst_51 = arith.constant 0.000000e+00 : f32
    %133 = vector.broadcast %cst_51 : f32 to vector<8x512xf32>
    %134 = arith.cmpf ogt, %132, %133 : vector<8x512xf32>
    %cst_52 = arith.constant 1.000000e-01 : f32
    %135 = vector.broadcast %cst_52 : f32 to vector<8x512xf32>
    %136 = arith.mulf %135, %132 : vector<8x512xf32>
    %137 = arith.select %134, %132, %136 : vector<8x512xi1>, vector<8x512xf32>
    %138 = vector.extract_strided_slice %137 {offsets = [0, 0], sizes = [8, 256], strides = [1, 1]} : vector<8x512xf32> to vector<8x256xf32>
    %cst_53 = arith.constant dense<0.000000e+00> : vector<8xf32>
    %139 = vector.multi_reduction <add>, %138, %cst_53 [1] : vector<8x256xf32> to vector<8xf32>
    %140 = vector.shape_cast %139 : vector<8xf32> to vector<8x1xf32>
    %cst_54 = arith.constant 2.560000e+02 : f32
    %141 = vector.broadcast %cst_54 : f32 to vector<8x1xf32>
    %142 = arith.divf %140, %141 : vector<8x1xf32>
    %143 = vector.broadcast %142 : vector<8x1xf32> to vector<8x2xf32>
    %144 = arith.mulf %6, %143 : vector<8x2xf32>
    %cst_55 = arith.constant dense<0.000000e+00> : vector<2xf32>
    %145 = vector.multi_reduction <add>, %144, %cst_55 [0] : vector<8x2xf32> to vector<2xf32>
    %146 = vector.shape_cast %145 : vector<2xf32> to vector<1x2xf32>
    %147 = arith.addf %146, %11 : vector<1x2xf32>
    %cst_56 = arith.constant 0.000000e+00 : f32
    %148 = vector.broadcast %cst_56 : f32 to vector<1x2xf32>
    %149 = arith.maximumf %147, %148 : vector<1x2xf32>
    %150 = vector.broadcast %149 : vector<1x2xf32> to vector<8x2xf32>
    %151 = arith.mulf %7, %150 : vector<8x2xf32>
    %cst_57 = arith.constant dense<0.000000e+00> : vector<8xf32>
    %152 = vector.multi_reduction <add>, %151, %cst_57 [1] : vector<8x2xf32> to vector<8xf32>
    %153 = vector.shape_cast %152 : vector<8xf32> to vector<8x1xf32>
    %154 = arith.addf %153, %8 : vector<8x1xf32>
    %cst_58 = arith.constant 3.000000e+00 : f32
    %155 = vector.broadcast %cst_58 : f32 to vector<8x1xf32>
    %156 = arith.addf %154, %155 : vector<8x1xf32>
    %cst_59 = arith.constant 0.000000e+00 : f32
    %cst_60 = arith.constant 6.000000e+00 : f32
    %157 = vector.broadcast %cst_59 : f32 to vector<8x1xf32>
    %158 = arith.maximumf %157, %156 : vector<8x1xf32>
    %159 = vector.broadcast %cst_60 : f32 to vector<8x1xf32>
    %160 = arith.minimumf %159, %158 : vector<8x1xf32>
    %161 = arith.mulf %154, %160 : vector<8x1xf32>
    %cst_61 = arith.constant 0.166666672 : f32
    %162 = vector.broadcast %cst_61 : f32 to vector<8x1xf32>
    %163 = arith.mulf %161, %162 : vector<8x1xf32>
    %c9 = arith.constant 9 : index
    %c0_62 = arith.constant 0 : index
    %164 = vector.load %arg2[%c9, %c0_62] : memref<16x512xf32, #tpu.memory_space<vmem>>, vector<1x512xf32>
    %165 = vector.broadcast %163 : vector<8x1xf32> to vector<8x512xf32>
    %166 = vector.broadcast %164 : vector<1x512xf32> to vector<8x512xf32>
    %167 = arith.mulf %165, %166 : vector<8x512xf32>
    %168 = vector.extract_strided_slice %137 {offsets = [0, 256], sizes = [8, 256], strides = [1, 1]} : vector<8x512xf32> to vector<8x256xf32>
    %cst_63 = arith.constant dense<0.000000e+00> : vector<8xf32>
    %169 = vector.multi_reduction <add>, %168, %cst_63 [1] : vector<8x256xf32> to vector<8xf32>
    %170 = vector.shape_cast %169 : vector<8xf32> to vector<8x1xf32>
    %cst_64 = arith.constant 2.560000e+02 : f32
    %171 = vector.broadcast %cst_64 : f32 to vector<8x1xf32>
    %172 = arith.divf %170, %171 : vector<8x1xf32>
    %173 = vector.broadcast %172 : vector<8x1xf32> to vector<8x2xf32>
    %174 = arith.mulf %6, %173 : vector<8x2xf32>
    %cst_65 = arith.constant dense<0.000000e+00> : vector<2xf32>
    %175 = vector.multi_reduction <add>, %174, %cst_65 [0] : vector<8x2xf32> to vector<2xf32>
    %176 = vector.shape_cast %175 : vector<2xf32> to vector<1x2xf32>
    %177 = arith.addf %176, %11 : vector<1x2xf32>
    %cst_66 = arith.constant 0.000000e+00 : f32
    %178 = vector.broadcast %cst_66 : f32 to vector<1x2xf32>
    %179 = arith.maximumf %177, %178 : vector<1x2xf32>
    %180 = vector.broadcast %179 : vector<1x2xf32> to vector<8x2xf32>
    %181 = arith.mulf %7, %180 : vector<8x2xf32>
    %cst_67 = arith.constant dense<0.000000e+00> : vector<8xf32>
    %182 = vector.multi_reduction <add>, %181, %cst_67 [1] : vector<8x2xf32> to vector<8xf32>
    %183 = vector.shape_cast %182 : vector<8xf32> to vector<8x1xf32>
    %184 = arith.addf %183, %8 : vector<8x1xf32>
    %cst_68 = arith.constant 3.000000e+00 : f32
    %185 = vector.broadcast %cst_68 : f32 to vector<8x1xf32>
    %186 = arith.addf %184, %185 : vector<8x1xf32>
    %cst_69 = arith.constant 0.000000e+00 : f32
    %cst_70 = arith.constant 6.000000e+00 : f32
    %187 = vector.broadcast %cst_69 : f32 to vector<8x1xf32>
    %188 = arith.maximumf %187, %186 : vector<8x1xf32>
    %189 = vector.broadcast %cst_70 : f32 to vector<8x1xf32>
    %190 = arith.minimumf %189, %188 : vector<8x1xf32>
    %191 = arith.mulf %184, %190 : vector<8x1xf32>
    %cst_71 = arith.constant 0.166666672 : f32
    %192 = vector.broadcast %cst_71 : f32 to vector<8x1xf32>
    %193 = arith.mulf %191, %192 : vector<8x1xf32>
    %c10 = arith.constant 10 : index
    %c0_72 = arith.constant 0 : index
    %194 = vector.load %arg2[%c10, %c0_72] : memref<16x512xf32, #tpu.memory_space<vmem>>, vector<1x512xf32>
    %195 = vector.broadcast %193 : vector<8x1xf32> to vector<8x512xf32>
    %196 = vector.broadcast %194 : vector<1x512xf32> to vector<8x512xf32>
    %197 = arith.mulf %195, %196 : vector<8x512xf32>
    %198 = arith.addf %167, %197 : vector<8x512xf32>
    %199 = arith.mulf %137, %198 : vector<8x512xf32>
    %cst_73 = arith.constant dense<0.000000e+00> : vector<8x512xf32>
    %200 = tpu.matmul %9, %199, %cst_73 {dimension_numbers = #tpu.dot_dimension_numbers<[1], [0], [0], [1], [0, 0, 1, 1], [], []>} : vector<8x8xf32>, vector<8x512xf32>, vector<8x512xf32> -> vector<8x512xf32>
    %201 = vector.broadcast %10 : vector<8x1xf32> to vector<8x512xf32>
    %202 = arith.addf %200, %201 : vector<8x512xf32>
    %cst_74 = arith.constant 0.000000e+00 : f32
    %203 = vector.broadcast %cst_74 : f32 to vector<8x512xf32>
    %204 = arith.cmpf ogt, %202, %203 : vector<8x512xf32>
    %cst_75 = arith.constant 1.000000e-01 : f32
    %205 = vector.broadcast %cst_75 : f32 to vector<8x512xf32>
    %206 = arith.mulf %205, %202 : vector<8x512xf32>
    %207 = arith.select %204, %202, %206 : vector<8x512xi1>, vector<8x512xf32>
    %208 = arith.addf %207, %63 : vector<8x512xf32>
    %c0_76 = arith.constant 0 : index
    %c0_77 = arith.constant 0 : index
    %209 = vector.load %arg4[%c0_76, %c0_77] : memref<8x512xf32, #tpu.memory_space<vmem>>, vector<8x512xf32>
    tpu.vector_store %arg4[%c0_76, %c0_77], %208 {strides = array<i32>} : memref<8x512xf32, #tpu.memory_space<vmem>>, vector<8x512xf32>,
    return
  }
  func.func @transform_0(%arg0: i32) -> (i32, i32) {
    %c0_i32 = arith.constant 0 : i32
    %c0_i32_0 = arith.constant 0 : i32
    %c0_i32_1 = arith.constant 0 : i32
    return %c0_i32, %c0_i32_0 : i32, i32
  }
  func.func @transform_1(%arg0: i32) -> (i32, i32) {
    %c0_i32 = arith.constant 0 : i32
    %c0_i32_0 = arith.constant 0 : i32
    %c0_i32_1 = arith.constant 0 : i32
    return %c0_i32, %c0_i32_0 : i32, i32
  }
  func.func @transform_2(%arg0: i32) -> (i32, i32) {
    %c0_i32 = arith.constant 0 : i32
    %c0_i32_0 = arith.constant 0 : i32
    %c0_i32_1 = arith.constant 0 : i32
    return %c0_i32, %c0_i32_0 : i32, i32
  }
  func.func @transform_3(%arg0: i32) -> (i32, i32) {
    %c0_i32 = arith.constant 0 : i32
    %c0_i32_0 = arith.constant 0 : i32
    %c0_i32_1 = arith.constant 0 : i32
    return %c0_i32, %c0_i32_0 : i32, i32
  }
}

</mosaic_0001>

<llo_original>
// kernel: mobilenetv3_block.1
$region0: #{mobilenetv3_block.1}
  #allocation0 [shape = 'u32[]', space=smem, size = 0x4, offset = 0x4, fixed_abs, tag = 'smem constant byte address 0x4 - core index']
  #allocation1 [shape = 'u32[144,128]{1,0:T(1,128)}', space=vmem, size = 0x12000, scoped, tag = 'internal scratch']
  #allocation2 [shape = 'f32[72,512]{1,0:T(8,128)}', space=vmem, size = 0x24000, scoped, tag = 'scratch operand']
  %s0 = inlined_call_operand.vmem [shape: f32[8,512], index: 0, kind: input, shape index: {}]
  %s1 = inlined_call_operand.vmem [shape: f32[16,512], index: 1, kind: input, shape index: {}]
  %s2 = inlined_call_operand.vmem [shape: f32[16,128], index: 2, kind: input, shape index: {}]
  %s3 = inlined_call_operand.vmem [shape: f32[8,512], index: 3, kind: output, shape index: {}]
  %s4 = sld [smem:[#allocation0]]
  $region22: #{mobilenetv3_block.1} parent=0
    _
  %s6 = ssub.s32 1, %s4
  %s7 = scalar_select 0, %s6, %s4
  // Predicated region
  $region2: #{mobilenetv3_block.1} parent=0 // pred_check
    _
  $region3: #{mobilenetv3_block.1} parent=0 // pred_check_branch
    %9 = sbr.rel (0) target = $region5
  $region4: #{mobilenetv3_block.1} parent=0 // pred_region
    _
  $region5: #{mobilenetv3_block.1} parent=0 // pred_fallthru
    _
  // Predicated region
  $region6: #{mobilenetv3_block.1} parent=0 // pred_check
    _
  $region7: #{mobilenetv3_block.1} parent=0 // pred_check_branch
    %11 = sbr.rel (0) target = $region9
  $region8: #{mobilenetv3_block.1} parent=0 // pred_region
    _
  $region9: #{mobilenetv3_block.1} parent=0 // pred_fallthru
    _
  // Predicated region
  $region10: #{mobilenetv3_block.1} parent=0 // pred_check
    _
  $region11: #{mobilenetv3_block.1} parent=0 // pred_check_branch
    %13 = sbr.rel (0) target = $region13
  $region12: #{mobilenetv3_block.1} parent=0 // pred_region
    _
  $region13: #{mobilenetv3_block.1} parent=0 // pred_fallthru
    _
  %v14 = vld [vmem:[%s0] sm:$0xff]
  %v15 = vld [vmem:[%s0 + $0x8] sm:$0xff]
  %v16 = vld [vmem:[%s0 + $0x10] sm:$0xff]
  %v17 = vld [vmem:[%s0 + $0x18] sm:$0xff]
  %v18 = vld [vmem:[%s2] sm:$0xff]
  %v19 = vld [vmem:[%s2 + $0x8] sm:$0xff]
  %20 = vrot.lane.b32.xlu0 %v14, 17
  %v21 = vpop.permute.xlu0 %20
  %22 = vrot.lane.b32.xlu0 %v15, 17
  %v23 = vpop.permute.xlu0 %22
  %24 = vrot.lane.b32.xlu0 %v16, 17
  %v25 = vpop.permute.xlu0 %24
  %26 = vrot.lane.b32.xlu0 %v17, 17
  %v27 = vpop.permute.xlu0 %26
  %v28 = vlaneseq
  %v29 = vand.u32 %v28, 127
  %vm30 = vcmp.lt.s32.totalorder %v29, 17
  %v31 = vsel %vm30, %v25, %v27
  %v32 = vsel %vm30, %v23, %v25
  %v33 = vsel %vm30, %v21, %v23
  %v34 = vsel %vm30, %v27, %v21
  %v35 = vld [vmem:[%s1] ss:$8 sm:$0xf]
  %v37 = vlaneseq
  %v38 = vshrl.u32 %v37, 7
  %v39 = vsub.s32 0, %v38
  %v40 = vrot.slane %v35, %v39
  %v41 = vlaneseq
  %v42 = vshrl.u32 %v41, 7
  %v43 = vsub.s32 1, %v42
  %v44 = vrot.slane %v35, %v43
  %v45 = vlaneseq
  %v46 = vshrl.u32 %v45, 7
  %v47 = vsub.s32 2, %v46
  %v48 = vrot.slane %v35, %v47
  %v49 = vlaneseq
  %v50 = vshrl.u32 %v49, 7
  %v51 = vsub.s32 3, %v50
  %v52 = vrot.slane %v35, %v51
  %v57 = vmul.f32 %v34, %v40
  %v58 = vmul.f32 %v33, %v44
  %v59 = vmul.f32 %v32, %v48
  %v60 = vmul.f32 %v31, %v52
  %61 = vrot.lane.b32.xlu0 %v14, 16
  %v62 = vpop.permute.xlu0 %61
  %63 = vrot.lane.b32.xlu0 %v15, 16
  %v64 = vpop.permute.xlu0 %63
  %65 = vrot.lane.b32.xlu0 %v16, 16
  %v66 = vpop.permute.xlu0 %65
  %67 = vrot.lane.b32.xlu0 %v17, 16
  %v68 = vpop.permute.xlu0 %67
  %vm69 = vcmp.lt.s32.totalorder %v29, 16
  %v70 = vsel %vm69, %v66, %v68
  %v71 = vsel %vm69, %v64, %v66
  %v72 = vsel %vm69, %v62, %v64
  %v73 = vsel %vm69, %v68, %v62
  %s74 = scalar_lea.vmem %s1, 1
  %v75 = vld [vmem:[%s74] ss:$8 sm:$0xf]
  %v77 = vlaneseq
  %v78 = vshrl.u32 %v77, 7
  %v79 = vsub.s32 0, %v78
  %v80 = vrot.slane %v75, %v79
  %v81 = vlaneseq
  %v82 = vshrl.u32 %v81, 7
  %v83 = vsub.s32 1, %v82
  %v84 = vrot.slane %v75, %v83
  %v85 = vlaneseq
  %v86 = vshrl.u32 %v85, 7
  %v87 = vsub.s32 2, %v86
  %v88 = vrot.slane %v75, %v87
  %v89 = vlaneseq
  %v90 = vshrl.u32 %v89, 7
  %v91 = vsub.s32 3, %v90
  %v92 = vrot.slane %v75, %v91
  %v97 = vmul.f32 %v73, %v80
  %v98 = vmul.f32 %v72, %v84
  %v99 = vmul.f32 %v71, %v88
  %v100 = vmul.f32 %v70, %v92
  %101 = vrot.lane.b32.xlu0 %v14, 15
  %v102 = vpop.permute.xlu0 %101
  %103 = vrot.lane.b32.xlu0 %v15, 15
  %v104 = vpop.permute.xlu0 %103
  %105 = vrot.lane.b32.xlu0 %v16, 15
  %v106 = vpop.permute.xlu0 %105
  %107 = vrot.lane.b32.xlu0 %v17, 15
  %v108 = vpop.permute.xlu0 %107
  %vm109 = vcmp.lt.s32.totalorder %v29, 15
  %v110 = vsel %vm109, %v106, %v108
  %v111 = vsel %vm109, %v104, %v106
  %v112 = vsel %vm109, %v102, %v104
  %v113 = vsel %vm109, %v108, %v102
  %s114 = scalar_lea.vmem %s1, 2
  %v115 = vld [vmem:[%s114] ss:$8 sm:$0xf]
  %v117 = vlaneseq
  %v118 = vshrl.u32 %v117, 7
  %v119 = vsub.s32 0, %v118
  %v120 = vrot.slane %v115, %v119
  %v121 = vlaneseq
  %v122 = vshrl.u32 %v121, 7
  %v123 = vsub.s32 1, %v122
  %v124 = vrot.slane %v115, %v123
  %v125 = vlaneseq
  %v126 = vshrl.u32 %v125, 7
  %v127 = vsub.s32 2, %v126
  %v128 = vrot.slane %v115, %v127
  %v129 = vlaneseq
  %v130 = vshrl.u32 %v129, 7
  %v131 = vsub.s32 3, %v130
  %v132 = vrot.slane %v115, %v131
  %v137 = vmul.f32 %v113, %v120
  %v138 = vmul.f32 %v112, %v124
  %v139 = vmul.f32 %v111, %v128
  %v140 = vmul.f32 %v110, %v132
  %141 = vrot.lane.b32.xlu0 %v14, 1
  %v142 = vpop.permute.xlu0 %141
  %143 = vrot.lane.b32.xlu0 %v15, 1
  %v144 = vpop.permute.xlu0 %143
  %145 = vrot.lane.b32.xlu0 %v16, 1
  %v146 = vpop.permute.xlu0 %145
  %147 = vrot.lane.b32.xlu0 %v17, 1
  %v148 = vpop.permute.xlu0 %147
  %vm149 = vcmp.lt.s32.totalorder %v29, 1
  %v150 = vsel %vm149, %v146, %v148
  %v151 = vsel %vm149, %v144, %v146
  %v152 = vsel %vm149, %v142, %v144
  %v153 = vsel %vm149, %v148, %v142
  %s154 = scalar_lea.vmem %s1, 3
  %v155 = vld [vmem:[%s154] ss:$8 sm:$0xf]
  %v157 = vlaneseq
  %v158 = vshrl.u32 %v157, 7
  %v159 = vsub.s32 0, %v158
  %v160 = vrot.slane %v155, %v159
  %v161 = vlaneseq
  %v162 = vshrl.u32 %v161, 7
  %v163 = vsub.s32 1, %v162
  %v164 = vrot.slane %v155, %v163
  %v165 = vlaneseq
  %v166 = vshrl.u32 %v165, 7
  %v167 = vsub.s32 2, %v166
  %v168 = vrot.slane %v155, %v167
  %v169 = vlaneseq
  %v170 = vshrl.u32 %v169, 7
  %v171 = vsub.s32 3, %v170
  %v172 = vrot.slane %v155, %v171
  %v177 = vmul.f32 %v153, %v160
  %v178 = vmul.f32 %v152, %v164
  %v179 = vmul.f32 %v151, %v168
  %v180 = vmul.f32 %v150, %v172
  %181 = vrot.lane.b32.xlu0 %v14, 127
  %v182 = vpop.permute.xlu0 %181
  %183 = vrot.lane.b32.xlu0 %v15, 127
  %v184 = vpop.permute.xlu0 %183
  %185 = vrot.lane.b32.xlu0 %v16, 127
  %v186 = vpop.permute.xlu0 %185
  %187 = vrot.lane.b32.xlu0 %v17, 127
  %v188 = vpop.permute.xlu0 %187
  %vm189 = vcmp.lt.s32.totalorder %v29, 127
  %v190 = vsel %vm189, %v186, %v188
  %v191 = vsel %vm189, %v184, %v186
  %v192 = vsel %vm189, %v182, %v184
  %v193 = vsel %vm189, %v188, %v182
  %s194 = scalar_lea.vmem %s1, 5
  %v195 = vld [vmem:[%s194] ss:$8 sm:$0xf]
  %v197 = vlaneseq
  %v198 = vshrl.u32 %v197, 7
  %v199 = vsub.s32 0, %v198
  %v200 = vrot.slane %v195, %v199
  %v201 = vlaneseq
  %v202 = vshrl.u32 %v201, 7
  %v203 = vsub.s32 1, %v202
  %v204 = vrot.slane %v195, %v203
  %v205 = vlaneseq
  %v206 = vshrl.u32 %v205, 7
  %v207 = vsub.s32 2, %v206
  %v208 = vrot.slane %v195, %v207
  %v209 = vlaneseq
  %v210 = vshrl.u32 %v209, 7
  %v211 = vsub.s32 3, %v210
  %v212 = vrot.slane %v195, %v211
  %v217 = vmul.f32 %v192, %v200
  %v218 = vmul.f32 %v191, %v204
  %v219 = vmul.f32 %v190, %v208
  %v220 = vmul.f32 %v193, %v212
  %221 = vrot.lane.b32.xlu0 %v14, 113
  %v222 = vpop.permute.xlu0 %221
  %223 = vrot.lane.b32.xlu0 %v15, 113
  %v224 = vpop.permute.xlu0 %223
  %225 = vrot.lane.b32.xlu0 %v16, 113
  %v226 = vpop.permute.xlu0 %225
  %227 = vrot.lane.b32.xlu0 %v17, 113
  %v228 = vpop.permute.xlu0 %227
  %vm229 = vcmp.lt.s32.totalorder %v29, 113
  %v230 = vsel %vm229, %v226, %v228
  %v231 = vsel %vm229, %v224, %v226
  %v232 = vsel %vm229, %v222, %v224
  %v233 = vsel %vm229, %v228, %v222
  %s234 = scalar_lea.vmem %s1, 6
  %v235 = vld [vmem:[%s234] ss:$8 sm:$0xf]
  %v237 = vlaneseq
  %v238 = vshrl.u32 %v237, 7
  %v239 = vsub.s32 0, %v238
  %v240 = vrot.slane %v235, %v239
  %v241 = vlaneseq
  %v242 = vshrl.u32 %v241, 7
  %v243 = vsub.s32 1, %v242
  %v244 = vrot.slane %v235, %v243
  %v245 = vlaneseq
  %v246 = vshrl.u32 %v245, 7
  %v247 = vsub.s32 2, %v246
  %v248 = vrot.slane %v235, %v247
  %v249 = vlaneseq
  %v250 = vshrl.u32 %v249, 7
  %v251 = vsub.s32 3, %v250
  %v252 = vrot.slane %v235, %v251
  %v257 = vmul.f32 %v232, %v240
  %v258 = vmul.f32 %v231, %v244
  %v259 = vmul.f32 %v230, %v248
  %v260 = vmul.f32 %v233, %v252
  %261 = vrot.lane.b32.xlu0 %v14, 112
  %v262 = vpop.permute.xlu0 %261
  %263 = vrot.lane.b32.xlu0 %v15, 112
  %v264 = vpop.permute.xlu0 %263
  %265 = vrot.lane.b32.xlu0 %v16, 112
  %v266 = vpop.permute.xlu0 %265
  %267 = vrot.lane.b32.xlu0 %v17, 112
  %v268 = vpop.permute.xlu0 %267
  %vm269 = vcmp.lt.s32.totalorder %v29, 112
  %v270 = vsel %vm269, %v266, %v268
  %v271 = vsel %vm269, %v264, %v266
  %v272 = vsel %vm269, %v262, %v264
  %v273 = vsel %vm269, %v268, %v262
  %s274 = scalar_lea.vmem %s1, 7
  %v275 = vld [vmem:[%s274] ss:$8 sm:$0xf]
  %v277 = vlaneseq
  %v278 = vshrl.u32 %v277, 7
  %v279 = vsub.s32 0, %v278
  %v280 = vrot.slane %v275, %v279
  %v281 = vlaneseq
  %v282 = vshrl.u32 %v281, 7
  %v283 = vsub.s32 1, %v282
  %v284 = vrot.slane %v275, %v283
  %v285 = vlaneseq
  %v286 = vshrl.u32 %v285, 7
  %v287 = vsub.s32 2, %v286
  %v288 = vrot.slane %v275, %v287
  %v289 = vlaneseq
  %v290 = vshrl.u32 %v289, 7
  %v291 = vsub.s32 3, %v290
  %v292 = vrot.slane %v275, %v291
  %v297 = vmul.f32 %v272, %v280
  %v298 = vmul.f32 %v271, %v284
  %v299 = vmul.f32 %v270, %v288
  %v300 = vmul.f32 %v273, %v292
  %301 = vrot.lane.b32.xlu0 %v14, 111
  %v302 = vpop.permute.xlu0 %301
  %303 = vrot.lane.b32.xlu0 %v15, 111
  %v304 = vpop.permute.xlu0 %303
  %305 = vrot.lane.b32.xlu0 %v16, 111
  %v306 = vpop.permute.xlu0 %305
  %307 = vrot.lane.b32.xlu0 %v17, 111
  %v308 = vpop.permute.xlu0 %307
  %vm309 = vcmp.lt.s32.totalorder %v29, 111
  %v310 = vsel %vm309, %v306, %v308
  %v311 = vsel %vm309, %v304, %v306
  %v312 = vsel %vm309, %v302, %v304
  %v313 = vsel %vm309, %v308, %v302
  %s314 = scalar_lea.vmem %s1, 32
  %v315 = vld [vmem:[%s314] ss:$8 sm:$0xf]
  %v317 = vlaneseq
  %v318 = vshrl.u32 %v317, 7
  %v319 = vsub.s32 0, %v318
  %v320 = vrot.slane %v315, %v319
  %v321 = vlaneseq
  %v322 = vshrl.u32 %v321, 7
  %v323 = vsub.s32 1, %v322
  %v324 = vrot.slane %v315, %v323
  %v325 = vlaneseq
  %v326 = vshrl.u32 %v325, 7
  %v327 = vsub.s32 2, %v326
  %v328 = vrot.slane %v315, %v327
  %v329 = vlaneseq
  %v330 = vshrl.u32 %v329, 7
  %v331 = vsub.s32 3, %v330
  %v332 = vrot.slane %v315, %v331
  %v337 = vmul.f32 %v312, %v320
  %v338 = vmul.f32 %v311, %v324
  %v339 = vmul.f32 %v310, %v328
  %v340 = vmul.f32 %v313, %v332
  %341 = vst [vmem:[#allocation2] sm:$0xff] %v57
  %342 = vst [vmem:[#allocation2 + $0x8] sm:$0xff] %v58
  %343 = vst [vmem:[#allocation2 + $0x10] sm:$0xff] %v59
  %344 = vst [vmem:[#allocation2 + $0x18] sm:$0xff] %v60
  %345 = vst [vmem:[#allocation2 + $0x20] sm:$0xff] %v97
  %346 = vst [vmem:[#allocation2 + $0x28] sm:$0xff] %v98
  %347 = vst [vmem:[#allocation2 + $0x30] sm:$0xff] %v99
  %348 = vst [vmem:[#allocation2 + $0x38] sm:$0xff] %v100
  %349 = vst [vmem:[#allocation2 + $0x40] sm:$0xff] %v137
  %350 = vst [vmem:[#allocation2 + $0x48] sm:$0xff] %v138
  %351 = vst [vmem:[#allocation2 + $0x50] sm:$0xff] %v139
  %352 = vst [vmem:[#allocation2 + $0x58] sm:$0xff] %v140
  %353 = vst [vmem:[#allocation2 + $0x60] sm:$0xff] %v177
  %354 = vst [vmem:[#allocation2 + $0x68] sm:$0xff] %v178
  %355 = vst [vmem:[#allocation2 + $0x70] sm:$0xff] %v179
  %356 = vst [vmem:[#allocation2 + $0x78] sm:$0xff] %v180
  %357 = vst [vmem:[#allocation2 + $0x80] sm:$0xff] %v14
  %358 = vst [vmem:[#allocation2 + $0x88] sm:$0xff] %v15
  %359 = vst [vmem:[#allocation2 + $0x90] sm:$0xff] %v16
  %360 = vst [vmem:[#allocation2 + $0x98] sm:$0xff] %v17
  %361 = vst [vmem:[#allocation2 + $0xa0] sm:$0xff] %v217
  %362 = vst [vmem:[#allocation2 + $0xa8] sm:$0xff] %v218
  %363 = vst [vmem:[#allocation2 + $0xb0] sm:$0xff] %v219
  %364 = vst [vmem:[#allocation2 + $0xb8] sm:$0xff] %v220
  %365 = vst [vmem:[#allocation2 + $0xc0] sm:$0xff] %v257
  %366 = vst [vmem:[#allocation2 + $0xc8] sm:$0xff] %v258
  %367 = vst [vmem:[#allocation2 + $0xd0] sm:$0xff] %v259
  %368 = vst [vmem:[#allocation2 + $0xd8] sm:$0xff] %v260
  %369 = vst [vmem:[#allocation2 + $0xe0] sm:$0xff] %v297
  %370 = vst [vmem:[#allocation2 + $0xe8] sm:$0xff] %v298
  %371 = vst [vmem:[#allocation2 + $0xf0] sm:$0xff] %v299
  %372 = vst [vmem:[#allocation2 + $0xf8] sm:$0xff] %v300
  %373 = vst [vmem:[#allocation2 + $0x100] sm:$0xff] %v337
  %374 = vst [vmem:[#allocation2 + $0x108] sm:$0xff] %v338
  %375 = vst [vmem:[#allocation2 + $0x110] sm:$0xff] %v339
  %376 = vst [vmem:[#allocation2 + $0x118] sm:$0xff] %v340
  %v377 = vld [vmem:[#allocation2] sm:$0xff]
  %v378 = vld [vmem:[#allocation2 + $0x8] sm:$0xff]
  %v379 = vld [vmem:[#allocation2 + $0x10] sm:$0xff]
  %v380 = vld [vmem:[#allocation2 + $0x18] sm:$0xff]
  %v381 = vld [vmem:[#allocation2 + $0x20] sm:$0xff]
  %v382 = vld [vmem:[#allocation2 + $0x28] sm:$0xff]
  %v383 = vld [vmem:[#allocation2 + $0x30] sm:$0xff]
  %v384 = vld [vmem:[#allocation2 + $0x38] sm:$0xff]
  %v385 = vld [vmem:[#allocation2 + $0x40] sm:$0xff]
  %v386 = vld [vmem:[#allocation2 + $0x48] sm:$0xff]
  %v387 = vld [vmem:[#allocation2 + $0x50] sm:$0xff]
  %v388 = vld [vmem:[#allocation2 + $0x58] sm:$0xff]
  %v389 = vld [vmem:[#allocation2 + $0x60] sm:$0xff]
  %v390 = vld [vmem:[#allocation2 + $0x68] sm:$0xff]
  %v391 = vld [vmem:[#allocation2 + $0x70] sm:$0xff]
  %v392 = vld [vmem:[#allocation2 + $0x78] sm:$0xff]
  %v393 = vld [vmem:[#allocation2 + $0x80] sm:$0xff]
  %v394 = vld [vmem:[#allocation2 + $0x88] sm:$0xff]
  %v395 = vld [vmem:[#allocation2 + $0x90] sm:$0xff]
  %v396 = vld [vmem:[#allocation2 + $0x98] sm:$0xff]
  %v397 = vld [vmem:[#allocation2 + $0xa0] sm:$0xff]
  %v398 = vld [vmem:[#allocation2 + $0xa8] sm:$0xff]
  %v399 = vld [vmem:[#allocation2 + $0xb0] sm:$0xff]
  %v400 = vld [vmem:[#allocation2 + $0xb8] sm:$0xff]
  %v401 = vld [vmem:[#allocation2 + $0xc0] sm:$0xff]
  %v402 = vld [vmem:[#allocation2 + $0xc8] sm:$0xff]
  %v403 = vld [vmem:[#allocation2 + $0xd0] sm:$0xff]
  %v404 = vld [vmem:[#allocation2 + $0xd8] sm:$0xff]
  %v405 = vld [vmem:[#allocation2 + $0xe0] sm:$0xff]
  %v406 = vld [vmem:[#allocation2 + $0xe8] sm:$0xff]
  %v407 = vld [vmem:[#allocation2 + $0xf0] sm:$0xff]
  %v408 = vld [vmem:[#allocation2 + $0xf8] sm:$0xff]
  %v409 = vld [vmem:[#allocation2 + $0x100] sm:$0xff]
  %v410 = vld [vmem:[#allocation2 + $0x108] sm:$0xff]
  %v411 = vld [vmem:[#allocation2 + $0x110] sm:$0xff]
  %v412 = vld [vmem:[#allocation2 + $0x118] sm:$0xff]
  %414 = vset.pattern.permute.xlu0 72
  %415 = vperm.xlu0 %414, %v18
  %v416 = vpop.permute.xlu0 %415
  %419 = vset.pattern.permute.xlu0 72
  %420 = vperm.xlu0 %419, %v19
  %v421 = vpop.permute.xlu0 %420
  %vm423 = vcmask 588800
  %v424 = vsel %vm423, %v18, 0
  %v426 = vsel %vm423, %v19, 0
  %428 = vmatprep.subr.mxu0 0.0
  %429 = vmatpush1.msra.mxu0 0.0
  %430 = vmatprep.subr.mxu0 0.0
  %431 = vmatpush1.msra.mxu0 0.0
  %432 = vmatprep.subr.mxu0 0.0
  %433 = vmatpush1.msra.mxu0 0.0
  %434 = vmatprep.subr.mxu0 0.0
  %435 = vmatpush1.msra.mxu0 0.0
  %436 = vmatprep.subr.mxu0 0.0
  %437 = vmatpush1.msra.mxu0 0.0
  %438 = vmatprep.subr.mxu0 0.0
  %439 = vmatpush1.msra.mxu0 0.0
  %440 = vmatprep.subr.mxu0 0.0
  %441 = vmatpush1.msra.mxu0 0.0
  %442 = vmatprep.subr.mxu0 %v410
  %443 = vmatpush1.msra.mxu0 %v409
  %444 = vmatprep.subr.mxu0 %v406
  %445 = vmatpush1.msra.mxu0 %v405
  %446 = vmatprep.subr.mxu0 %v402
  %447 = vmatpush1.msra.mxu0 %v401
  %448 = vmatprep.subr.mxu0 %v398
  %449 = vmatpush1.msra.mxu0 %v397
  %450 = vmatprep.subr.mxu0 %v394
  %451 = vmatpush1.msra.mxu0 %v393
  %452 = vmatprep.subr.mxu0 %v390
  %453 = vmatpush1.msra.mxu0 %v389
  %454 = vmatprep.subr.mxu0 %v386
  %455 = vmatpush1.msra.mxu0 %v385
  %456 = vmatprep.subr.mxu0 %v382
  %457 = vmatpush1.msra.mxu0 %v381
  %458 = vmatprep.subr.mxu0 %v378
  %459 = vmatpush1.msra.mxu0 %v377
  %460 = vmatprep.subr.mxu0 0.0
  %461 = vmatpush2.msra.mxu0 0.0
  %462 = vmatprep.subr.mxu0 0.0
  %463 = vmatpush2.msra.mxu0 0.0
  %464 = vmatprep.subr.mxu0 0.0
  %465 = vmatpush2.msra.mxu0 0.0
  %466 = vmatprep.subr.mxu0 0.0
  %467 = vmatpush2.msra.mxu0 0.0
  %468 = vmatprep.subr.mxu0 0.0
  %469 = vmatpush2.msra.mxu0 0.0
  %470 = vmatprep.subr.mxu0 0.0
  %471 = vmatpush2.msra.mxu0 0.0
  %472 = vmatprep.subr.mxu0 0.0
  %473 = vmatpush2.msra.mxu0 0.0
  %474 = vmatprep.subr.mxu0 0.0
  %475 = vmatpush2.msra.mxu0 0.0
  %476 = vmatprep.subr.mxu0 0.0
  %477 = vmatpush2.msra.mxu0 0.0
  %478 = vmatprep.subr.mxu0 0.0
  %479 = vmatpush2.msra.mxu0 0.0
  %480 = vmatprep.subr.mxu0 0.0
  %481 = vmatpush2.msra.mxu0 0.0
  %482 = vmatprep.subr.mxu0 0.0
  %483 = vmatpush2.msra.mxu0 0.0
  %484 = vmatprep.subr.mxu0 0.0
  %485 = vmatpush2.msra.mxu0 0.0
  %486 = vmatprep.subr.mxu0 0.0
  %487 = vmatpush2.msra.mxu0 0.0
  %488 = vmatprep.subr.mxu0 0.0
  %489 = vmatpush2.msra.mxu0 0.0
  %490 = vmatprep.subr.mxu0 0.0
  %491 = vmatpush2.msra.mxu0 0.0
  %492 = vmatprep.mubr.f32.mxu0 0.0
  %493 = vmatmul.mubr.f32.gmra.mxu0 %v424
  %v494 = vpop.f32.mrf.mxu0
  %v495 = vadd.f32 %v416, %v494
  %v496 = vpop.f32.mrf.mxu0
  %v497 = vadd.f32 %v416, %v496
  %498 = vmatprep.mubr.f32.mxu0 0.0
  %499 = vmatmul.mubr.f32.gmra.mxu0 %v426
  %v500 = vpop.f32.mrf.mxu0
  %v501 = vadd.f32 %v421, %v500
  %v502 = vpop.f32.mrf.mxu0
  %v503 = vadd.f32 %v421, %v502
  %504 = vdwg.mxu0
  %505 = vmatprep.subr.mxu0 0.0
  %506 = vmatpush1.msra.mxu0 0.0
  %507 = vmatprep.subr.mxu0 0.0
  %508 = vmatpush1.msra.mxu0 0.0
  %509 = vmatprep.subr.mxu0 0.0
  %510 = vmatpush1.msra.mxu0 0.0
  %511 = vmatprep.subr.mxu0 0.0
  %512 = vmatpush1.msra.mxu0 0.0
  %513 = vmatprep.subr.mxu0 0.0
  %514 = vmatpush1.msra.mxu0 0.0
  %515 = vmatprep.subr.mxu0 0.0
  %516 = vmatpush1.msra.mxu0 0.0
  %517 = vmatprep.subr.mxu0 0.0
  %518 = vmatpush1.msra.mxu0 0.0
  %519 = vmatprep.subr.mxu0 %v412
  %520 = vmatpush1.msra.mxu0 %v411
  %521 = vmatprep.subr.mxu0 %v408
  %522 = vmatpush1.msra.mxu0 %v407
  %523 = vmatprep.subr.mxu0 %v404
  %524 = vmatpush1.msra.mxu0 %v403
  %525 = vmatprep.subr.mxu0 %v400
  %526 = vmatpush1.msra.mxu0 %v399
  %527 = vmatprep.subr.mxu0 %v396
  %528 = vmatpush1.msra.mxu0 %v395
  %529 = vmatprep.subr.mxu0 %v392
  %530 = vmatpush1.msra.mxu0 %v391
  %531 = vmatprep.subr.mxu0 %v388
  %532 = vmatpush1.msra.mxu0 %v387
  %533 = vmatprep.subr.mxu0 %v384
  %534 = vmatpush1.msra.mxu0 %v383
  %535 = vmatprep.subr.mxu0 %v380
  %536 = vmatpush1.msra.mxu0 %v379
  %537 = vmatprep.subr.mxu0 0.0
  %538 = vmatpush2.msra.mxu0 0.0
  %539 = vmatprep.subr.mxu0 0.0
  %540 = vmatpush2.msra.mxu0 0.0
  %541 = vmatprep.subr.mxu0 0.0
  %542 = vmatpush2.msra.mxu0 0.0
  %543 = vmatprep.subr.mxu0 0.0
  %544 = vmatpush2.msra.mxu0 0.0
  %545 = vmatprep.subr.mxu0 0.0
  %546 = vmatpush2.msra.mxu0 0.0
  %547 = vmatprep.subr.mxu0 0.0
  %548 = vmatpush2.msra.mxu0 0.0
  %549 = vmatprep.subr.mxu0 0.0
  %550 = vmatpush2.msra.mxu0 0.0
  %551 = vmatprep.subr.mxu0 0.0
  %552 = vmatpush2.msra.mxu0 0.0
  %553 = vmatprep.subr.mxu0 0.0
  %554 = vmatpush2.msra.mxu0 0.0
  %555 = vmatprep.subr.mxu0 0.0
  %556 = vmatpush2.msra.mxu0 0.0
  %557 = vmatprep.subr.mxu0 0.0
  %558 = vmatpush2.msra.mxu0 0.0
  %559 = vmatprep.subr.mxu0 0.0
  %560 = vmatpush2.msra.mxu0 0.0
  %561 = vmatprep.subr.mxu0 0.0
  %562 = vmatpush2.msra.mxu0 0.0
  %563 = vmatprep.subr.mxu0 0.0
  %564 = vmatpush2.msra.mxu0 0.0
  %565 = vmatprep.subr.mxu0 0.0
  %566 = vmatpush2.msra.mxu0 0.0
  %567 = vmatprep.subr.mxu0 0.0
  %568 = vmatpush2.msra.mxu0 0.0
  %569 = vmatprep.mubr.f32.mxu0 0.0
  %570 = vmatmul.mubr.f32.gmra.mxu0 %v424
  %v571 = vpop.f32.mrf.mxu0
  %v572 = vadd.f32 %v416, %v571
  %v573 = vpop.f32.mrf.mxu0
  %v574 = vadd.f32 %v416, %v573
  %575 = vmatprep.mubr.f32.mxu0 0.0
  %576 = vmatmul.mubr.f32.gmra.mxu0 %v426
  %v577 = vpop.f32.mrf.mxu0
  %v578 = vadd.f32 %v421, %v577
  %v579 = vpop.f32.mrf.mxu0
  %v580 = vadd.f32 %v421, %v579
  %581 = vdwg.mxu0
  %vm582 = vcmp.gt.f32.partialorder %v495, 0.0
  %vm583 = vcmp.gt.f32.partialorder %v497, 0.0
  %vm584 = vcmp.gt.f32.partialorder %v572, 0.0
  %vm585 = vcmp.gt.f32.partialorder %v574, 0.0
  %v586 = vmul.f32 %v495, 0.1
  %v587 = vmul.f32 %v497, 0.1
  %v588 = vmul.f32 %v572, 0.1
  %v589 = vmul.f32 %v574, 0.1
  %v590 = vsel %vm582, %v495, %v586
  %v591 = vsel %vm583, %v497, %v587
  %v592 = vsel %vm584, %v572, %v588
  %v593 = vsel %vm585, %v574, %v589
  %594 = vrot.lane.b32.xlu0 %v590, 17
  %v595 = vpop.permute.xlu0 %594
  %596 = vrot.lane.b32.xlu0 %v591, 17
  %v597 = vpop.permute.xlu0 %596
  %598 = vrot.lane.b32.xlu0 %v592, 17
  %v599 = vpop.permute.xlu0 %598
  %600 = vrot.lane.b32.xlu0 %v593, 17
  %v601 = vpop.permute.xlu0 %600
  %v602 = vsel %vm30, %v599, %v601
  %v603 = vsel %vm30, %v597, %v599
  %v604 = vsel %vm30, %v595, %v597
  %v605 = vsel %vm30, %v601, %v595
  %v606 = vld [vmem:[%s1] ss:$8 sm:$0xf]
  %v608 = vlaneseq
  %v609 = vshrl.u32 %v608, 7
  %v610 = vsub.s32 0, %v609
  %v611 = vrot.slane %v606, %v610
  %v612 = vlaneseq
  %v613 = vshrl.u32 %v612, 7
  %v614 = vsub.s32 1, %v613
  %v615 = vrot.slane %v606, %v614
  %v616 = vlaneseq
  %v617 = vshrl.u32 %v616, 7
  %v618 = vsub.s32 2, %v617
  %v619 = vrot.slane %v606, %v618
  %v620 = vlaneseq
  %v621 = vshrl.u32 %v620, 7
  %v622 = vsub.s32 3, %v621
  %v623 = vrot.slane %v606, %v622
  %v628 = vmul.f32 %v605, %v611
  %v629 = vmul.f32 %v604, %v615
  %v630 = vmul.f32 %v603, %v619
  %v631 = vmul.f32 %v602, %v623
  %632 = vrot.lane.b32.xlu0 %v590, 16
  %v633 = vpop.permute.xlu0 %632
  %634 = vrot.lane.b32.xlu0 %v591, 16
  %v635 = vpop.permute.xlu0 %634
  %636 = vrot.lane.b32.xlu0 %v592, 16
  %v637 = vpop.permute.xlu0 %636
  %638 = vrot.lane.b32.xlu0 %v593, 16
  %v639 = vpop.permute.xlu0 %638
  %v640 = vsel %vm69, %v637, %v639
  %v641 = vsel %vm69, %v635, %v637
  %v642 = vsel %vm69, %v633, %v635
  %v643 = vsel %vm69, %v639, %v633
  %v644 = vld [vmem:[%s74] ss:$8 sm:$0xf]
  %v646 = vlaneseq
  %v647 = vshrl.u32 %v646, 7
  %v648 = vsub.s32 0, %v647
  %v649 = vrot.slane %v644, %v648
  %v650 = vlaneseq
  %v651 = vshrl.u32 %v650, 7
  %v652 = vsub.s32 1, %v651
  %v653 = vrot.slane %v644, %v652
  %v654 = vlaneseq
  %v655 = vshrl.u32 %v654, 7
  %v656 = vsub.s32 2, %v655
  %v657 = vrot.slane %v644, %v656
  %v658 = vlaneseq
  %v659 = vshrl.u32 %v658, 7
  %v660 = vsub.s32 3, %v659
  %v661 = vrot.slane %v644, %v660
  %v666 = vmul.f32 %v643, %v649
  %v667 = vmul.f32 %v642, %v653
  %v668 = vmul.f32 %v641, %v657
  %v669 = vmul.f32 %v640, %v661
  %670 = vrot.lane.b32.xlu0 %v590, 15
  %v671 = vpop.permute.xlu0 %670
  %672 = vrot.lane.b32.xlu0 %v591, 15
  %v673 = vpop.permute.xlu0 %672
  %674 = vrot.lane.b32.xlu0 %v592, 15
  %v675 = vpop.permute.xlu0 %674
  %676 = vrot.lane.b32.xlu0 %v593, 15
  %v677 = vpop.permute.xlu0 %676
  %v678 = vsel %vm109, %v675, %v677
  %v679 = vsel %vm109, %v673, %v675
  %v680 = vsel %vm109, %v671, %v673
  %v681 = vsel %vm109, %v677, %v671
  %v682 = vld [vmem:[%s114] ss:$8 sm:$0xf]
  %v684 = vlaneseq
  %v685 = vshrl.u32 %v684, 7
  %v686 = vsub.s32 0, %v685
  %v687 = vrot.slane %v682, %v686
  %v688 = vlaneseq
  %v689 = vshrl.u32 %v688, 7
  %v690 = vsub.s32 1, %v689
  %v691 = vrot.slane %v682, %v690
  %v692 = vlaneseq
  %v693 = vshrl.u32 %v692, 7
  %v694 = vsub.s32 2, %v693
  %v695 = vrot.slane %v682, %v694
  %v696 = vlaneseq
  %v697 = vshrl.u32 %v696, 7
  %v698 = vsub.s32 3, %v697
  %v699 = vrot.slane %v682, %v698
  %v704 = vmul.f32 %v681, %v687
  %v705 = vmul.f32 %v680, %v691
  %v706 = vmul.f32 %v679, %v695
  %v707 = vmul.f32 %v678, %v699
  %708 = vrot.lane.b32.xlu0 %v590, 1
  %v709 = vpop.permute.xlu0 %708
  %710 = vrot.lane.b32.xlu0 %v591, 1
  %v711 = vpop.permute.xlu0 %710
  %712 = vrot.lane.b32.xlu0 %v592, 1
  %v713 = vpop.permute.xlu0 %712
  %714 = vrot.lane.b32.xlu0 %v593, 1
  %v715 = vpop.permute.xlu0 %714
  %v716 = vsel %vm149, %v713, %v715
  %v717 = vsel %vm149, %v711, %v713
  %v718 = vsel %vm149, %v709, %v711
  %v719 = vsel %vm149, %v715, %v709
  %v720 = vld [vmem:[%s154] ss:$8 sm:$0xf]
  %v722 = vlaneseq
  %v723 = vshrl.u32 %v722, 7
  %v724 = vsub.s32 0, %v723
  %v725 = vrot.slane %v720, %v724
  %v726 = vlaneseq
  %v727 = vshrl.u32 %v726, 7
  %v728 = vsub.s32 1, %v727
  %v729 = vrot.slane %v720, %v728
  %v730 = vlaneseq
  %v731 = vshrl.u32 %v730, 7
  %v732 = vsub.s32 2, %v731
  %v733 = vrot.slane %v720, %v732
  %v734 = vlaneseq
  %v735 = vshrl.u32 %v734, 7
  %v736 = vsub.s32 3, %v735
  %v737 = vrot.slane %v720, %v736
  %v742 = vmul.f32 %v719, %v725
  %v743 = vmul.f32 %v718, %v729
  %v744 = vmul.f32 %v717, %v733
  %v745 = vmul.f32 %v716, %v737
  %746 = vrot.lane.b32.xlu0 %v590, 127
  %v747 = vpop.permute.xlu0 %746
  %748 = vrot.lane.b32.xlu0 %v591, 127
  %v749 = vpop.permute.xlu0 %748
  %750 = vrot.lane.b32.xlu0 %v592, 127
  %v751 = vpop.permute.xlu0 %750
  %752 = vrot.lane.b32.xlu0 %v593, 127
  %v753 = vpop.permute.xlu0 %752
  %v754 = vsel %vm189, %v751, %v753
  %v755 = vsel %vm189, %v749, %v751
  %v756 = vsel %vm189, %v747, %v749
  %v757 = vsel %vm189, %v753, %v747
  %v758 = vld [vmem:[%s194] ss:$8 sm:$0xf]
  %v760 = vlaneseq
  %v761 = vshrl.u32 %v760, 7
  %v762 = vsub.s32 0, %v761
  %v763 = vrot.slane %v758, %v762
  %v764 = vlaneseq
  %v765 = vshrl.u32 %v764, 7
  %v766 = vsub.s32 1, %v765
  %v767 = vrot.slane %v758, %v766
  %v768 = vlaneseq
  %v769 = vshrl.u32 %v768, 7
  %v770 = vsub.s32 2, %v769
  %v771 = vrot.slane %v758, %v770
  %v772 = vlaneseq
  %v773 = vshrl.u32 %v772, 7
  %v774 = vsub.s32 3, %v773
  %v775 = vrot.slane %v758, %v774
  %v780 = vmul.f32 %v756, %v763
  %v781 = vmul.f32 %v755, %v767
  %v782 = vmul.f32 %v754, %v771
  %v783 = vmul.f32 %v757, %v775
  %784 = vrot.lane.b32.xlu0 %v590, 113
  %v785 = vpop.permute.xlu0 %784
  %786 = vrot.lane.b32.xlu0 %v591, 113
  %v787 = vpop.permute.xlu0 %786
  %788 = vrot.lane.b32.xlu0 %v592, 113
  %v789 = vpop.permute.xlu0 %788
  %790 = vrot.lane.b32.xlu0 %v593, 113
  %v791 = vpop.permute.xlu0 %790
  %v792 = vsel %vm229, %v789, %v791
  %v793 = vsel %vm229, %v787, %v789
  %v794 = vsel %vm229, %v785, %v787
  %v795 = vsel %vm229, %v791, %v785
  %v796 = vld [vmem:[%s234] ss:$8 sm:$0xf]
  %v798 = vlaneseq
  %v799 = vshrl.u32 %v798, 7
  %v800 = vsub.s32 0, %v799
  %v801 = vrot.slane %v796, %v800
  %v802 = vlaneseq
  %v803 = vshrl.u32 %v802, 7
  %v804 = vsub.s32 1, %v803
  %v805 = vrot.slane %v796, %v804
  %v806 = vlaneseq
  %v807 = vshrl.u32 %v806, 7
  %v808 = vsub.s32 2, %v807
  %v809 = vrot.slane %v796, %v808
  %v810 = vlaneseq
  %v811 = vshrl.u32 %v810, 7
  %v812 = vsub.s32 3, %v811
  %v813 = vrot.slane %v796, %v812
  %v818 = vmul.f32 %v794, %v801
  %v819 = vmul.f32 %v793, %v805
  %v820 = vmul.f32 %v792, %v809
  %v821 = vmul.f32 %v795, %v813
  %822 = vrot.lane.b32.xlu0 %v590, 112
  %v823 = vpop.permute.xlu0 %822
  %824 = vrot.lane.b32.xlu0 %v591, 112
  %v825 = vpop.permute.xlu0 %824
  %826 = vrot.lane.b32.xlu0 %v592, 112
  %v827 = vpop.permute.xlu0 %826
  %828 = vrot.lane.b32.xlu0 %v593, 112
  %v829 = vpop.permute.xlu0 %828
  %v830 = vsel %vm269, %v827, %v829
  %v831 = vsel %vm269, %v825, %v827
  %v832 = vsel %vm269, %v823, %v825
  %v833 = vsel %vm269, %v829, %v823
  %v834 = vld [vmem:[%s274] ss:$8 sm:$0xf]
  %v836 = vlaneseq
  %v837 = vshrl.u32 %v836, 7
  %v838 = vsub.s32 0, %v837
  %v839 = vrot.slane %v834, %v838
  %v840 = vlaneseq
  %v841 = vshrl.u32 %v840, 7
  %v842 = vsub.s32 1, %v841
  %v843 = vrot.slane %v834, %v842
  %v844 = vlaneseq
  %v845 = vshrl.u32 %v844, 7
  %v846 = vsub.s32 2, %v845
  %v847 = vrot.slane %v834, %v846
  %v848 = vlaneseq
  %v849 = vshrl.u32 %v848, 7
  %v850 = vsub.s32 3, %v849
  %v851 = vrot.slane %v834, %v850
  %v856 = vmul.f32 %v832, %v839
  %v857 = vmul.f32 %v831, %v843
  %v858 = vmul.f32 %v830, %v847
  %v859 = vmul.f32 %v833, %v851
  %860 = vrot.lane.b32.xlu0 %v590, 111
  %v861 = vpop.permute.xlu0 %860
  %862 = vrot.lane.b32.xlu0 %v591, 111
  %v863 = vpop.permute.xlu0 %862
  %864 = vrot.lane.b32.xlu0 %v592, 111
  %v865 = vpop.permute.xlu0 %864
  %866 = vrot.lane.b32.xlu0 %v593, 111
  %v867 = vpop.permute.xlu0 %866
  %v868 = vsel %vm309, %v865, %v867
  %v869 = vsel %vm309, %v863, %v865
  %v870 = vsel %vm309, %v861, %v863
  %v871 = vsel %vm309, %v867, %v861
  %v872 = vld [vmem:[%s314] ss:$8 sm:$0xf]
  %v874 = vlaneseq
  %v875 = vshrl.u32 %v874, 7
  %v876 = vsub.s32 0, %v875
  %v877 = vrot.slane %v872, %v876
  %v878 = vlaneseq
  %v879 = vshrl.u32 %v878, 7
  %v880 = vsub.s32 1, %v879
  %v881 = vrot.slane %v872, %v880
  %v882 = vlaneseq
  %v883 = vshrl.u32 %v882, 7
  %v884 = vsub.s32 2, %v883
  %v885 = vrot.slane %v872, %v884
  %v886 = vlaneseq
  %v887 = vshrl.u32 %v886, 7
  %v888 = vsub.s32 3, %v887
  %v889 = vrot.slane %v872, %v888
  %v894 = vmul.f32 %v870, %v877
  %v895 = vmul.f32 %v869, %v881
  %v896 = vmul.f32 %v868, %v885
  %v897 = vmul.f32 %v871, %v889
  %898 = vset.pattern.permute.xlu0 73
  %899 = vperm.xlu0 %898, %v18
  %v900 = vpop.permute.xlu0 %899
  %v902 = vmul.f32 %v628, %v900
  %v903 = vmul.f32 %v629, %v900
  %v904 = vmul.f32 %v630, %v900
  %v905 = vmul.f32 %v631, %v900
  %906 = vset.pattern.permute.xlu0 74
  %907 = vperm.xlu0 %906, %v18
  %v908 = vpop.permute.xlu0 %907
  %v910 = vmul.f32 %v666, %v908
  %v911 = vmul.f32 %v667, %v908
  %v912 = vmul.f32 %v668, %v908
  %v913 = vmul.f32 %v669, %v908
  %914 = vset.pattern.permute.xlu0 75
  %915 = vperm.xlu0 %914, %v18
  %v916 = vpop.permute.xlu0 %915
  %v918 = vmul.f32 %v704, %v916
  %v919 = vmul.f32 %v705, %v916
  %v920 = vmul.f32 %v706, %v916
  %v921 = vmul.f32 %v707, %v916
  %922 = vset.pattern.permute.xlu0 76
  %923 = vperm.xlu0 %922, %v18
  %v924 = vpop.permute.xlu0 %923
  %v926 = vmul.f32 %v742, %v924
  %v927 = vmul.f32 %v743, %v924
  %v928 = vmul.f32 %v744, %v924
  %v929 = vmul.f32 %v745, %v924
  %930 = vset.pattern.permute.xlu0 77
  %931 = vperm.xlu0 %930, %v18
  %v932 = vpop.permute.xlu0 %931
  %v934 = vmul.f32 %v590, %v932
  %v935 = vmul.f32 %v591, %v932
  %v936 = vmul.f32 %v592, %v932
  %v937 = vmul.f32 %v593, %v932
  %938 = vset.pattern.permute.xlu0 78
  %939 = vperm.xlu0 %938, %v18
  %v940 = vpop.permute.xlu0 %939
  %v942 = vmul.f32 %v780, %v940
  %v943 = vmul.f32 %v781, %v940
  %v944 = vmul.f32 %v782, %v940
  %v945 = vmul.f32 %v783, %v940
  %946 = vset.pattern.permute.xlu0 79
  %947 = vperm.xlu0 %946, %v18
  %v948 = vpop.permute.xlu0 %947
  %v950 = vmul.f32 %v818, %v948
  %v951 = vmul.f32 %v819, %v948
  %v952 = vmul.f32 %v820, %v948
  %v953 = vmul.f32 %v821, %v948
  %954 = vset.pattern.permute.xlu0 80
  %955 = vperm.xlu0 %954, %v18
  %v956 = vpop.permute.xlu0 %955
  %v958 = vmul.f32 %v856, %v956
  %v959 = vmul.f32 %v857, %v956
  %v960 = vmul.f32 %v858, %v956
  %v961 = vmul.f32 %v859, %v956
  %962 = vset.pattern.permute.xlu0 81
  %963 = vperm.xlu0 %962, %v18
  %v964 = vpop.permute.xlu0 %963
  %v966 = vmul.f32 %v894, %v964
  %v967 = vmul.f32 %v895, %v964
  %v968 = vmul.f32 %v896, %v964
  %v969 = vmul.f32 %v897, %v964
  %v970 = vadd.f32 %v902, %v910
  %v971 = vadd.f32 %v903, %v911
  %v972 = vadd.f32 %v904, %v912
  %v973 = vadd.f32 %v905, %v913
  %v974 = vadd.f32 %v918, %v926
  %v975 = vadd.f32 %v919, %v927
  %v976 = vadd.f32 %v920, %v928
  %v977 = vadd.f32 %v921, %v929
  %v978 = vadd.f32 %v934, %v942
  %v979 = vadd.f32 %v935, %v943
  %v980 = vadd.f32 %v936, %v944
  %v981 = vadd.f32 %v937, %v945
  %v982 = vadd.f32 %v950, %v958
  %v983 = vadd.f32 %v951, %v959
  %v984 = vadd.f32 %v952, %v960
  %v985 = vadd.f32 %v953, %v961
  %v986 = vadd.f32 %v970, %v974
  %v987 = vadd.f32 %v971, %v975
  %v988 = vadd.f32 %v972, %v976
  %v989 = vadd.f32 %v973, %v977
  %v990 = vadd.f32 %v978, %v982
  %v991 = vadd.f32 %v979, %v983
  %v992 = vadd.f32 %v980, %v984
  %v993 = vadd.f32 %v981, %v985
  %v994 = vadd.f32 %v986, %v990
  %v995 = vadd.f32 %v987, %v991
  %v996 = vadd.f32 %v988, %v992
  %v997 = vadd.f32 %v989, %v993
  %v998 = vadd.f32 %v994, %v966
  %v999 = vadd.f32 %v995, %v967
  %v1000 = vadd.f32 %v996, %v968
  %v1001 = vadd.f32 %v997, %v969
  %1002 = vset.pattern.permute.xlu0 82
  %1003 = vperm.xlu0 %1002, %v18
  %v1004 = vpop.permute.xlu0 %1003
  %v1006 = vadd.f32 %v998, %v1004
  %v1007 = vadd.f32 %v999, %v1004
  %v1008 = vadd.f32 %v1000, %v1004
  %v1009 = vadd.f32 %v1001, %v1004
  %vm1010 = vcmp.gt.f32.partialorder %v1006, 0.0
  %vm1011 = vcmp.gt.f32.partialorder %v1007, 0.0
  %vm1012 = vcmp.gt.f32.partialorder %v1008, 0.0
  %vm1013 = vcmp.gt.f32.partialorder %v1009, 0.0
  %v1014 = vmul.f32 %v1006, 0.1
  %v1015 = vmul.f32 %v1007, 0.1
  %v1016 = vmul.f32 %v1008, 0.1
  %v1017 = vmul.f32 %v1009, 0.1
  %v1018 = vsel %vm1010, %v1006, %v1014
  %v1019 = vsel %vm1011, %v1007, %v1015
  %v1020 = vsel %vm1012, %v1008, %v1016
  %v1021 = vsel %vm1013, %v1009, %v1017
  %v1022 = vadd.f32 %v1018, %v1019
  %1023 = vadd.xlane.f32.xlu0 %v1022
  %v1024 = vpop.xlane.xlu0 %1023
  %v1025 = vrcp.pop 256.0
  %v1026 = vmul.f32 %v1024, %v1025
  %v1027 = vmul.f32 %v18, %v1026
  %vm1028 = vcmask 695960
  %v1029 = vsel %vm1028, %v1027, 0.0
  %v1030 = vrot.slane %v1029, 4
  %v1031 = vadd.f32 %v1029, %v1030
  %v1032 = vrot.slane %v1031, 2
  %v1033 = vadd.f32 %v1031, %v1032
  %v1034 = vrot.slane %v1033, 1
  %v1035 = vadd.f32 %v1033, %v1034
  %1036 = vrot.lane.b32.xlu0 %v18, 114
  %v1037 = vpop.permute.xlu0 %1036
  %v1039 = vadd.f32 %v1035, %v1037
  %v1040 = vmax.f32 %v1039, 0.0
  %v1041 = vlaneseq
  %v1042 = vshrl.u32 %v1041, 7
  %v1043 = vsub.s32 0, %v1042
  %v1044 = vrot.slane %v1040, %v1043
  %1046 = vrot.lane.b32.xlu0 %v1044, 2
  %v1047 = vpop.permute.xlu0 %1046
  %v1049 = vmul.f32 %v18, %v1047
  %1051 = vrot.lane.b32.xlu0 %v1049, 43
  %v1052 = vpop.permute.xlu0 %1051
  %vm1054 = vcmask 15360
  %v1055 = vsel %vm1054, %v1052, 0.0
  %1056 = vadd.xlane.f32.xlu0 %v1055
  %v1057 = vpop.xlane.xlu0 %1056
  %v1058 = vadd.f32 %v1057, %v18
  %v1059 = vadd.f32 %v1058, 3.0
  %v1060 = vmax.f32 %v1059, 0.0
  %v1061 = vmin.f32 %v1060, 6.0
  %v1062 = vmul.f32 %v1058, %v1061
  %v1063 = vmul.f32 %v1062, 0.16666667
  %s1064 = scalar_lea.vmem %s1, 33
  %v1065 = vld [vmem:[%s1064] ss:$8 sm:$0xf]
  %1067 = vset.pattern.permute.xlu0 87
  %1068 = vperm.xlu0 %1067, %v1063
  %v1069 = vpop.permute.xlu0 %1068
  %v1072 = vlaneseq
  %v1073 = vshrl.u32 %v1072, 7
  %v1074 = vsub.s32 0, %v1073
  %v1075 = vrot.slane %v1065, %v1074
  %v1076 = vlaneseq
  %v1077 = vshrl.u32 %v1076, 7
  %v1078 = vsub.s32 1, %v1077
  %v1079 = vrot.slane %v1065, %v1078
  %v1080 = vlaneseq
  %v1081 = vshrl.u32 %v1080, 7
  %v1082 = vsub.s32 2, %v1081
  %v1083 = vrot.slane %v1065, %v1082
  %v1084 = vlaneseq
  %v1085 = vshrl.u32 %v1084, 7
  %v1086 = vsub.s32 3, %v1085
  %v1087 = vrot.slane %v1065, %v1086
  %v1092 = vmul.f32 %v1069, %v1075
  %v1093 = vmul.f32 %v1069, %v1079
  %v1094 = vmul.f32 %v1069, %v1083
  %v1095 = vmul.f32 %v1069, %v1087
  %v1096 = vadd.f32 %v1020, %v1021
  %1097 = vadd.xlane.f32.xlu0 %v1096
  %v1098 = vpop.xlane.xlu0 %1097
  %v1099 = vmul.f32 %v1098, %v1025
  %v1100 = vmul.f32 %v18, %v1099
  %v1101 = vsel %vm1028, %v1100, 0.0
  %v1102 = vrot.slane %v1101, 4
  %v1103 = vadd.f32 %v1101, %v1102
  %v1104 = vrot.slane %v1103, 2
  %v1105 = vadd.f32 %v1103, %v1104
  %v1106 = vrot.slane %v1105, 1
  %v1107 = vadd.f32 %v1105, %v1106
  %v1108 = vadd.f32 %v1107, %v1037
  %v1109 = vmax.f32 %v1108, 0.0
  %v1110 = vlaneseq
  %v1111 = vshrl.u32 %v1110, 7
  %v1112 = vsub.s32 0, %v1111
  %v1113 = vrot.slane %v1109, %v1112
  %1115 = vrot.lane.b32.xlu0 %v1113, 2
  %v1116 = vpop.permute.xlu0 %1115
  %v1118 = vmul.f32 %v18, %v1116
  %1120 = vrot.lane.b32.xlu0 %v1118, 43
  %v1121 = vpop.permute.xlu0 %1120
  %v1123 = vsel %vm1054, %v1121, 0.0
  %1124 = vadd.xlane.f32.xlu0 %v1123
  %v1125 = vpop.xlane.xlu0 %1124
  %v1126 = vadd.f32 %v1125, %v18
  %v1127 = vadd.f32 %v1126, 3.0
  %v1128 = vmax.f32 %v1127, 0.0
  %v1129 = vmin.f32 %v1128, 6.0
  %v1130 = vmul.f32 %v1126, %v1129
  %v1131 = vmul.f32 %v1130, 0.16666667
  %s1132 = scalar_lea.vmem %s1, 34
  %v1133 = vld [vmem:[%s1132] ss:$8 sm:$0xf]
  %1135 = vset.pattern.permute.xlu0 87
  %1136 = vperm.xlu0 %1135, %v1131
  %v1137 = vpop.permute.xlu0 %1136
  %v1140 = vlaneseq
  %v1141 = vshrl.u32 %v1140, 7
  %v1142 = vsub.s32 0, %v1141
  %v1143 = vrot.slane %v1133, %v1142
  %v1144 = vlaneseq
  %v1145 = vshrl.u32 %v1144, 7
  %v1146 = vsub.s32 1, %v1145
  %v1147 = vrot.slane %v1133, %v1146
  %v1148 = vlaneseq
  %v1149 = vshrl.u32 %v1148, 7
  %v1150 = vsub.s32 2, %v1149
  %v1151 = vrot.slane %v1133, %v1150
  %v1152 = vlaneseq
  %v1153 = vshrl.u32 %v1152, 7
  %v1154 = vsub.s32 3, %v1153
  %v1155 = vrot.slane %v1133, %v1154
  %v1160 = vmul.f32 %v1137, %v1143
  %v1161 = vmul.f32 %v1137, %v1147
  %v1162 = vmul.f32 %v1137, %v1151
  %v1163 = vmul.f32 %v1137, %v1155
  %v1164 = vadd.f32 %v1092, %v1160
  %v1165 = vadd.f32 %v1093, %v1161
  %v1166 = vadd.f32 %v1094, %v1162
  %v1167 = vadd.f32 %v1095, %v1163
  %v1168 = vmul.f32 %v1018, %v1164
  %v1169 = vmul.f32 %v1019, %v1165
  %v1170 = vmul.f32 %v1020, %v1166
  %v1171 = vmul.f32 %v1021, %v1167
  %1172 = vset.pattern.permute.xlu0 96
  %1173 = vperm.xlu0 %1172, %v18
  %v1174 = vpop.permute.xlu0 %1173
  %1176 = vrot.lane.b32.xlu0 %v18, 40
  %v1177 = vpop.permute.xlu0 %1176
  %vm1178 = vcmask 64512
  %v1179 = vsel %vm1178, %v1177, 0
  %1181 = vmatprep.subr.mxu0 0.0
  %1182 = vmatpush1.msra.mxu0 0.0
  %1183 = vmatprep.subr.mxu0 0.0
  %1184 = vmatpush1.msra.mxu0 0.0
  %1185 = vmatprep.subr.mxu0 0.0
  %1186 = vmatpush1.msra.mxu0 0.0
  %1187 = vmatprep.subr.mxu0 0.0
  %1188 = vmatpush1.msra.mxu0 0.0
  %1189 = vmatprep.subr.mxu0 0.0
  %1190 = vmatpush1.msra.mxu0 0.0
  %1191 = vmatprep.subr.mxu0 0.0
  %1192 = vmatpush1.msra.mxu0 0.0
  %1193 = vmatprep.subr.mxu0 0.0
  %1194 = vmatpush1.msra.mxu0 0.0
  %1195 = vmatprep.subr.mxu0 0.0
  %1196 = vmatpush1.msra.mxu0 0.0
  %1197 = vmatprep.subr.mxu0 0.0
  %1198 = vmatpush1.msra.mxu0 0.0
  %1199 = vmatprep.subr.mxu0 0.0
  %1200 = vmatpush1.msra.mxu0 0.0
  %1201 = vmatprep.subr.mxu0 0.0
  %1202 = vmatpush1.msra.mxu0 0.0
  %1203 = vmatprep.subr.mxu0 0.0
  %1204 = vmatpush1.msra.mxu0 0.0
  %1205 = vmatprep.subr.mxu0 0.0
  %1206 = vmatpush1.msra.mxu0 0.0
  %1207 = vmatprep.subr.mxu0 0.0
  %1208 = vmatpush1.msra.mxu0 0.0
  %1209 = vmatprep.subr.mxu0 0.0
  %1210 = vmatpush1.msra.mxu0 0.0
  %1211 = vmatprep.subr.mxu0 %v1169
  %1212 = vmatpush1.msra.mxu0 %v1168
  %1213 = vmatprep.subr.mxu0 0.0
  %1214 = vmatpush2.msra.mxu0 0.0
  %1215 = vmatprep.subr.mxu0 0.0
  %1216 = vmatpush2.msra.mxu0 0.0
  %1217 = vmatprep.subr.mxu0 0.0
  %1218 = vmatpush2.msra.mxu0 0.0
  %1219 = vmatprep.subr.mxu0 0.0
  %1220 = vmatpush2.msra.mxu0 0.0
  %1221 = vmatprep.subr.mxu0 0.0
  %1222 = vmatpush2.msra.mxu0 0.0
  %1223 = vmatprep.subr.mxu0 0.0
  %1224 = vmatpush2.msra.mxu0 0.0
  %1225 = vmatprep.subr.mxu0 0.0
  %1226 = vmatpush2.msra.mxu0 0.0
  %1227 = vmatprep.subr.mxu0 0.0
  %1228 = vmatpush2.msra.mxu0 0.0
  %1229 = vmatprep.subr.mxu0 0.0
  %1230 = vmatpush2.msra.mxu0 0.0
  %1231 = vmatprep.subr.mxu0 0.0
  %1232 = vmatpush2.msra.mxu0 0.0
  %1233 = vmatprep.subr.mxu0 0.0
  %1234 = vmatpush2.msra.mxu0 0.0
  %1235 = vmatprep.subr.mxu0 0.0
  %1236 = vmatpush2.msra.mxu0 0.0
  %1237 = vmatprep.subr.mxu0 0.0
  %1238 = vmatpush2.msra.mxu0 0.0
  %1239 = vmatprep.subr.mxu0 0.0
  %1240 = vmatpush2.msra.mxu0 0.0
  %1241 = vmatprep.subr.mxu0 0.0
  %1242 = vmatpush2.msra.mxu0 0.0
  %1243 = vmatprep.subr.mxu0 0.0
  %1244 = vmatpush2.msra.mxu0 0.0
  %1245 = vmatprep.mubr.f32.mxu0 0.0
  %1246 = vmatmul.mubr.f32.gmra.mxu0 %v1179
  %v1247 = vpop.f32.mrf.mxu0
  %v1248 = vadd.f32 %v1174, %v1247
  %v1249 = vpop.f32.mrf.mxu0
  %v1250 = vadd.f32 %v1174, %v1249
  %1251 = vdwg.mxu0
  %1252 = vmatprep.subr.mxu0 0.0
  %1253 = vmatpush1.msra.mxu0 0.0
  %1254 = vmatprep.subr.mxu0 0.0
  %1255 = vmatpush1.msra.mxu0 0.0
  %1256 = vmatprep.subr.mxu0 0.0
  %1257 = vmatpush1.msra.mxu0 0.0
  %1258 = vmatprep.subr.mxu0 0.0
  %1259 = vmatpush1.msra.mxu0 0.0
  %1260 = vmatprep.subr.mxu0 0.0
  %1261 = vmatpush1.msra.mxu0 0.0
  %1262 = vmatprep.subr.mxu0 0.0
  %1263 = vmatpush1.msra.mxu0 0.0
  %1264 = vmatprep.subr.mxu0 0.0
  %1265 = vmatpush1.msra.mxu0 0.0
  %1266 = vmatprep.subr.mxu0 0.0
  %1267 = vmatpush1.msra.mxu0 0.0
  %1268 = vmatprep.subr.mxu0 0.0
  %1269 = vmatpush1.msra.mxu0 0.0
  %1270 = vmatprep.subr.mxu0 0.0
  %1271 = vmatpush1.msra.mxu0 0.0
  %1272 = vmatprep.subr.mxu0 0.0
  %1273 = vmatpush1.msra.mxu0 0.0
  %1274 = vmatprep.subr.mxu0 0.0
  %1275 = vmatpush1.msra.mxu0 0.0
  %1276 = vmatprep.subr.mxu0 0.0
  %1277 = vmatpush1.msra.mxu0 0.0
  %1278 = vmatprep.subr.mxu0 0.0
  %1279 = vmatpush1.msra.mxu0 0.0
  %1280 = vmatprep.subr.mxu0 0.0
  %1281 = vmatpush1.msra.mxu0 0.0
  %1282 = vmatprep.subr.mxu0 %v1171
  %1283 = vmatpush1.msra.mxu0 %v1170
  %1284 = vmatprep.subr.mxu0 0.0
  %1285 = vmatpush2.msra.mxu0 0.0
  %1286 = vmatprep.subr.mxu0 0.0
  %1287 = vmatpush2.msra.mxu0 0.0
  %1288 = vmatprep.subr.mxu0 0.0
  %1289 = vmatpush2.msra.mxu0 0.0
  %1290 = vmatprep.subr.mxu0 0.0
  %1291 = vmatpush2.msra.mxu0 0.0
  %1292 = vmatprep.subr.mxu0 0.0
  %1293 = vmatpush2.msra.mxu0 0.0
  %1294 = vmatprep.subr.mxu0 0.0
  %1295 = vmatpush2.msra.mxu0 0.0
  %1296 = vmatprep.subr.mxu0 0.0
  %1297 = vmatpush2.msra.mxu0 0.0
  %1298 = vmatprep.subr.mxu0 0.0
  %1299 = vmatpush2.msra.mxu0 0.0
  %1300 = vmatprep.subr.mxu0 0.0
  %1301 = vmatpush2.msra.mxu0 0.0
  %1302 = vmatprep.subr.mxu0 0.0
  %1303 = vmatpush2.msra.mxu0 0.0
  %1304 = vmatprep.subr.mxu0 0.0
  %1305 = vmatpush2.msra.mxu0 0.0
  %1306 = vmatprep.subr.mxu0 0.0
  %1307 = vmatpush2.msra.mxu0 0.0
  %1308 = vmatprep.subr.mxu0 0.0
  %1309 = vmatpush2.msra.mxu0 0.0
  %1310 = vmatprep.subr.mxu0 0.0
  %1311 = vmatpush2.msra.mxu0 0.0
  %1312 = vmatprep.subr.mxu0 0.0
  %1313 = vmatpush2.msra.mxu0 0.0
  %1314 = vmatprep.subr.mxu0 0.0
  %1315 = vmatpush2.msra.mxu0 0.0
  %1316 = vmatprep.mubr.f32.mxu0 0.0
  %1317 = vmatmul.mubr.f32.gmra.mxu0 %v1179
  %v1318 = vpop.f32.mrf.mxu0
  %v1319 = vadd.f32 %v1174, %v1318
  %v1320 = vpop.f32.mrf.mxu0
  %v1321 = vadd.f32 %v1174, %v1320
  %1322 = vdwg.mxu0
  %vm1323 = vcmp.gt.f32.partialorder %v1248, 0.0
  %vm1324 = vcmp.gt.f32.partialorder %v1250, 0.0
  %vm1325 = vcmp.gt.f32.partialorder %v1319, 0.0
  %vm1326 = vcmp.gt.f32.partialorder %v1321, 0.0
  %v1327 = vmul.f32 %v1248, 0.1
  %v1328 = vmul.f32 %v1250, 0.1
  %v1329 = vmul.f32 %v1319, 0.1
  %v1330 = vmul.f32 %v1321, 0.1
  %v1331 = vsel %vm1323, %v1248, %v1327
  %v1332 = vsel %vm1324, %v1250, %v1328
  %v1333 = vsel %vm1325, %v1319, %v1329
  %v1334 = vsel %vm1326, %v1321, %v1330
  %v1335 = vadd.f32 %v1331, %v501
  %v1336 = vadd.f32 %v1332, %v503
  %v1337 = vadd.f32 %v1333, %v578
  %v1338 = vadd.f32 %v1334, %v580
  %1339 = vst [vmem:[%s3] sm:$0xff] %v1335
  %1340 = vst [vmem:[%s3 + $0x8] sm:$0xff] %v1336
  %1341 = vst [vmem:[%s3 + $0x10] sm:$0xff] %v1337
  %1342 = vst [vmem:[%s3 + $0x18] sm:$0xff] %v1338
  // Predicated region
  $region14: #{mobilenetv3_block.1} parent=0 // pred_check
    _
  $region15: #{mobilenetv3_block.1} parent=0 // pred_check_branch
    %1344 = sbr.rel (0) target = $region17
  $region16: #{mobilenetv3_block.1} parent=0 // pred_region
    _
  $region17: #{mobilenetv3_block.1} parent=0 // pred_fallthru
    _
  // Predicated region
  $region18: #{mobilenetv3_block.1} parent=0 // pred_check
    _
  $region19: #{mobilenetv3_block.1} parent=0 // pred_check_branch
    %1346 = sbr.rel (0) target = $region21
  $region20: #{mobilenetv3_block.1} parent=0 // pred_region
    _
  $region21: #{mobilenetv3_block.1} parent=0 // pred_fallthru
    _

</llo_original>
